<compile_context>
chip_gen: v6e
topology: v6e:2x2x1
jax: 0.10.0
libtpu: 0.0.40
codegen_flags: <defaults>
</compile_context>

<pallas_src>
import functools

import jax
import jax.numpy as jnp
from jax.experimental import pallas as pl
from jax.experimental.pallas import tpu as pltpu


# ---------------------------------------------------------------------------
# Fused kernel: enc1 -> enc2 -> dec1 -> dec2 (relu/relu/relu/sigmoid).
# Every GEMM's row space is (batch, per-image row index), R = tb * U, U = H // 4.
# ---------------------------------------------------------------------------
def _ae_kernel(x_ref, w1_ref, b1_ref, w2_ref, b2_ref, w3_ref, b3_ref,
               w4_ref, b4_ref, dec_ref, enc_ref, *, U):
    f32, bf16 = jnp.float32, jnp.bfloat16
    R = x_ref.shape[1]                                     # rows per block
    row = jax.lax.broadcasted_iota(jnp.int32, (R, 1), 0)
    first = (row % U) == 0                                 # first row of each image
    last = (row % U) == (U - 1)                            # last row of each image

    def mm(a, w_ref, kh):                                  # bf16 MXU, f32 accumulate
        return jnp.dot(a.astype(bf16), w_ref[kh], preferred_element_type=f32)

    def shift_dn(a):                                       # out[i] = a[i-1], 0 at image start
        return jnp.where(first, 0.0, pltpu.roll(a.astype(f32), 1, axis=0))

    def shift_up(a):                                       # out[i] = a[i+1], 0 at image end
        return jnp.where(last, 0.0, pltpu.roll(a.astype(f32), R - 1, axis=0))

    # ---- encoder ----------------------------------------------------------
    p0, p1, p2, p3 = x_ref[0], x_ref[1], x_ref[2], x_ref[3]   # input row phases (h mod 4)
    b1 = b1_ref[...]
    # conv1 (k=3, s=2, p=1): even output rows 2u read input rows {4u-1, 4u, 4u+1}
    h1e = jnp.maximum(mm(shift_dn(p3), w1_ref, 0) + mm(p0, w1_ref, 1)
                      + mm(p1, w1_ref, 2) + b1, 0.0)
    #                  odd output rows 2u+1 read input rows {4u+1, 4u+2, 4u+3}
    h1o = jnp.maximum(mm(p1, w1_ref, 0) + mm(p2, w1_ref, 1)
                      + mm(p3, w1_ref, 2) + b1, 0.0)
    # conv2: output row s reads h1 rows {2s-1, 2s, 2s+1}
    enc = jnp.maximum(mm(shift_dn(h1o), w2_ref, 0) + mm(h1e, w2_ref, 1)
                      + mm(h1o, w2_ref, 2) + b2_ref[...], 0.0)
    enc_ref[...] = enc                                     # encoded (f32)

    # ---- decoder ----------------------------------------------------------
    b3 = b3_ref[...]
    # convT1 (k=3, s=2, p=1, op=1): d1[2t] = enc[t]@K1 ; d1[2t+1] = enc[t]@K2 + enc[t+1]@K0
    d1e = jnp.maximum(mm(enc, w3_ref, 1) + b3, 0.0)
    d1o = jnp.maximum(mm(enc, w3_ref, 2) + mm(shift_up(enc), w3_ref, 0) + b3, 0.0)

    b4 = b4_ref[...]
    # convT2 over d1 = interleave(d1e, d1o); output row phase r = h mod 4
    q0 = mm(d1e, w4_ref, 1) + b4
    q1 = mm(d1e, w4_ref, 2) + mm(d1o, w4_ref, 0) + b4
    q2 = mm(d1o, w4_ref, 1) + b4
    q3 = mm(d1o, w4_ref, 2) + mm(shift_up(d1e), w4_ref, 0) + b4
    dec_ref[0] = jax.nn.sigmoid(q0)
    dec_ref[1] = jax.nn.sigmoid(q1)
    dec_ref[2] = jax.nn.sigmoid(q2)
    dec_ref[3] = jax.nn.sigmoid(q3)


def _pick_batch_tile(batch):
    """Cap the per-step batch tile so large batches get a multi-step grid
    (DMA/compute pipelining + v7x megacore split); tiny/odd batches use one block."""
    if batch % 8 != 0 or batch < 16:
        return batch
    tile = min(64, max(8, (batch // 4) // 8 * 8))
    while batch % tile:
        tile -= 8
    return tile


def _vmem_limit_bytes(prep, rows, w_img, n_enc):
    weights = sum(int(v.size) * v.dtype.itemsize for v in prep.values())
    io = rows * (4 * w_img * 2 + 4 * w_img * 4 + n_enc * 4)   # x / dec / enc blocks
    live = 8 * rows * max(n_enc, 8 * w_img) * 4               # bound on f32 intermediates
    total = 2 * (weights + io) + live                         # pipeline double-buffering
    return int(min(64 * 2 ** 20, max(32 * 2 ** 20, 2 * total)))


def ae_fused_call(x_phased_bf16, prep, batch, U, w_img):
    tile = _pick_batch_tile(batch)
    rows = tile * U
    n_enc = prep["w2"].shape[2]                               # (W//4) * 32

    def row_block(lead, cols):
        return pl.BlockSpec((lead, rows, cols), lambda i: (0, i, 0))

    def resident(arr):                                        # whole-array weights/biases
        return pl.BlockSpec(arr.shape, lambda i, _nd=arr.ndim: (0,) * _nd)

    kernel = functools.partial(_ae_kernel, U=U)
    return pl.pallas_call(
        kernel,
        out_shape=(jax.ShapeDtypeStruct((4, batch * U, w_img), jnp.float32),
                   jax.ShapeDtypeStruct((batch * U, n_enc), jnp.float32)),
        grid=(batch // tile,),
        in_specs=[row_block(4, w_img),
                  resident(prep["w1"]), resident(prep["b1"]),
                  resident(prep["w2"]), resident(prep["b2"]),
                  resident(prep["w3"]), resident(prep["b3"]),
                  resident(prep["w4"]), resident(prep["b4"])],
        out_specs=(row_block(4, w_img),
                   pl.BlockSpec((rows, n_enc), lambda i: (i, 0))),
        compiler_params=pltpu.CompilerParams(
            dimension_semantics=("parallel",),
            vmem_limit_bytes=_vmem_limit_bytes(prep, rows, w_img, n_enc)),
    )(x_phased_bf16, prep["w1"], prep["b1"], prep["w2"], prep["b2"],
      prep["w3"], prep["b3"], prep["w4"], prep["b4"])


# ---------------------------------------------------------------------------
# One-time weight repacking (pure JAX, outside the hot path): fold each conv /
# transposed conv over (kw, ci) into 3 per-kh banded GEMM operators + tiled bias.
# ---------------------------------------------------------------------------
def _conv_wfold(w_oihw, w_in):
    """Conv2d(k=3, s=2, p=1): op[kh][(wi,ci),(wo,co)] = sum_kw [wi==2wo+kw-1] w[co,ci,kh,kw]."""
    c_out, c_in, k, _ = w_oihw.shape
    w_out = w_in // 2
    wi = jnp.arange(w_in)
    taps = []
    for kh in range(k):
        op = jnp.zeros((w_in, c_in, w_out, c_out), jnp.float32)
        for kw in range(k):
            src = jnp.arange(w_out) * 2 + kw - 1                        # input col per output col
            sel = (wi[:, None] == src[None, :]).astype(jnp.float32)     # width pads drop out
            wk = w_oihw[:, :, kh, kw].T                                 # (c_in, c_out)
            op = op + sel[:, None, :, None] * wk[None, :, None, :]
        taps.append(op.reshape(w_in * c_in, w_out * c_out))
    return jnp.stack(taps)


def _convT_wfold(w_iohw, w_in):
    """ConvTranspose2d(k=3, s=2, p=1, op=1): op[kh][(wi,ci),(wo,co)] = sum_kw [wo==2wi-1+kw] w[ci,co,kh,kw]."""
    c_in, c_out, k, _ = w_iohw.shape
    w_out = 2 * w_in
    wo = jnp.arange(w_out)
    taps = []
    for kh in range(k):
        op = jnp.zeros((w_in, c_in, w_out, c_out), jnp.float32)
        for kw in range(k):
            dst = jnp.arange(w_in) * 2 - 1 + kw                         # output col per input col
            sel = (dst[:, None] == wo[None, :]).astype(jnp.float32)
            wk = w_iohw[:, :, kh, kw]                                   # (c_in, c_out)
            op = op + sel[:, None, :, None] * wk[None, :, None, :]
        taps.append(op.reshape(w_in * c_in, w_out * c_out))
    return jnp.stack(taps)


def _bias_tile(b, w_out):
    return jnp.broadcast_to(b, (w_out, b.shape[0])).reshape(1, -1).astype(jnp.float32)


def prepare_params(params, h_in, w_in):
    assert h_in % 4 == 0 and w_in % 4 == 0, "AE fold assumes H, W divisible by 4"
    op_bytes = 2 * 3 * (w_in * (w_in // 2) * 16
                        + (w_in // 2) * 16 * (w_in // 4) * 32
                        + (w_in // 4) * 32 * (w_in // 2) * 16
                        + (w_in // 2) * 16 * w_in)
    if op_bytes > 16 * 2 ** 20:
        # TODO(synk): for very wide images add a K/N-tiled grid axis over these
        # banded operators (pl.when-initialized accumulator) instead of failing.
        raise NotImplementedError("image too wide for the single-block banded path")
    return {
        "w1": _conv_wfold(params["enc1_w"], w_in).astype(jnp.bfloat16),
        "b1": _bias_tile(params["enc1_b"], w_in // 2),
        "w2": _conv_wfold(params["enc2_w"], w_in // 2).astype(jnp.bfloat16),
        "b2": _bias_tile(params["enc2_b"], w_in // 4),
        "w3": _convT_wfold(params["dec1_w"], w_in // 4).astype(jnp.bfloat16),
        "b3": _bias_tile(params["dec1_b"], w_in // 2),
        "w4": _convT_wfold(params["dec2_w"], w_in // 2).astype(jnp.bfloat16),
        "b4": _bias_tile(params["dec2_b"], w_in),
    }


# ---------------------------------------------------------------------------
# AE forward (matches the PyTorch module: returns (decoded, encoded) in NCHW).
# Note: bf16 MXU operands make outputs deviate slightly from an f32 reference
# (documented, intentional; checked below at 5e-2).
# ---------------------------------------------------------------------------
def ae_forward(x_nchw, prep):
    batch, c, h, w = x_nchw.shape
    assert c == 1 and h % 4 == 0 and w % 4 == 0, "expects grayscale, H and W divisible by 4"
    U = h // 4
    # split input rows into 4 phases (h mod 4) so all in-kernel row taps are local
    xp = (x_nchw[:, 0].reshape(batch, U, 4, w).transpose(2, 0, 1, 3)
          .reshape(4, batch * U, w).astype(jnp.bfloat16))
    dec_ph, enc2d = ae_fused_call(xp, prep, batch, U, w)
    decoded = (dec_ph.reshape(4, batch, U, w).transpose(1, 2, 0, 3)
               .reshape(batch, 1, h, w))
    encoded = enc2d.reshape(batch, h // 4, w // 4, 32).transpose(0, 3, 1, 2)
    return decoded, encoded


def init_params(key):
    ks = jax.random.split(key, 8)

    def u(k, shape, fan_in):
        bound = 1.0 / jnp.sqrt(jnp.float32(fan_in))
        return jax.random.uniform(k, shape, jnp.float32, -bound, bound)

    return {
        # Conv2d(1, 16, 3, stride=2, padding=1)
        "enc1_w": u(ks[0], (16, 1, 3, 3), 1 * 9),
        "enc1_b": u(ks[1], (16,), 1 * 9),
        # Conv2d(16, 32, 3, stride=2, padding=1)
        "enc2_w": u(ks[2], (32, 16, 3, 3), 16 * 9),
        "enc2_b": u(ks[3], (32,), 16 * 9),
        # ConvTranspose2d(32, 16, 3, stride=2, padding=1, output_padding=1)
        "dec1_w": u(ks[4], (32, 16, 3, 3), 32 * 9),
        "dec1_b": u(ks[5], (16,), 32 * 9),
        # ConvTranspose2d(16, 1, 3, stride=2, padding=1, output_padding=1)
        "dec2_w": u(ks[6], (16, 1, 3, 3), 16 * 9),
        "dec2_b": u(ks[7], (1,), 16 * 9),
    }


# ---------------------------------------------------------------------------
# Pure-JAX reference (XLA convs) used only to validate the kernel in __main__.
# ---------------------------------------------------------------------------
def _conv_ref(x, w, b, stride, pad):
    y = jax.lax.conv_general_dilated(
        x, w, (stride, stride), ((pad, pad), (pad, pad)),
        dimension_numbers=('NCHW', 'OIHW', 'NCHW'))
    return y + b[None, :, None, None]


def _convT_ref(x, w_iohw, b, stride, pad, out_pad):
    w = jnp.flip(w_iohw, (2, 3)).transpose(1, 0, 2, 3)      # -> (Cout, Cin, kh, kw)
    k = w.shape[2]
    p = (k - 1 - pad, k - 1 - pad + out_pad)
    y = jax.lax.conv_general_dilated(
        x, w, (1, 1), (p, p), lhs_dilation=(stride, stride),
        dimension_numbers=('NCHW', 'OIHW', 'NCHW'))
    return y + b[None, :, None, None]


def ae_reference(x, params):
    h1 = jax.nn.relu(_conv_ref(x, params["enc1_w"], params["enc1_b"], 2, 1))
    enc = jax.nn.relu(_conv_ref(h1, params["enc2_w"], params["enc2_b"], 2, 1))
    d1 = jax.nn.relu(_convT_ref(enc, params["dec1_w"], params["dec1_b"], 2, 1, 1))
    dec = jax.nn.sigmoid(_convT_ref(d1, params["dec2_w"], params["dec2_b"], 2, 1, 1))
    return dec, enc


if __name__ == "__main__":
    key = jax.random.PRNGKey(0)
    k_x, k_p = jax.random.split(key)
    params = init_params(k_p)

    # grayscale input, NCHW, spatial divisible by 4 (small test shape)
    x = jax.random.uniform(k_x, (2, 1, 16, 16), jnp.float32)

    prep = prepare_params(params, 16, 16)          # one-time weight repacking
    fwd = jax.jit(ae_forward)
    decoded, encoded = fwd(x, prep)
    jax.block_until_ready((decoded, encoded))

    assert decoded.shape == (2, 1, 16, 16), decoded.shape
    assert encoded.shape == (2, 32, 4, 4), encoded.shape
    assert bool(jnp.all(jnp.isfinite(decoded))) and bool(jnp.all(jnp.isfinite(encoded)))

    dec_ref, enc_ref = ae_reference(x, params)
    dec_err = float(jnp.max(jnp.abs(decoded - dec_ref)))
    enc_err = float(jnp.max(jnp.abs(encoded - enc_ref)))
    assert dec_err < 5e-2 and enc_err < 5e-2, (dec_err, enc_err)   # bf16 MXU tolerance

    print("KERNEL_OK")
</pallas_src>

<mosaic_0001>
module attributes {stable_mosaic.version = 11 : i64} {
  func.func @_ae_kernel(%arg0: i32, %arg1: memref<4x8x16xbf16, #tpu.memory_space<vmem>>, %arg2: memref<3x16x128xbf16, #tpu.memory_space<vmem>>, %arg3: memref<1x128xf32, #tpu.memory_space<vmem>>, %arg4: memref<3x128x128xbf16, #tpu.memory_space<vmem>>, %arg5: memref<1x128xf32, #tpu.memory_space<vmem>>, %arg6: memref<3x128x128xbf16, #tpu.memory_space<vmem>>, %arg7: memref<1x128xf32, #tpu.memory_space<vmem>>, %arg8: memref<3x128x16xbf16, #tpu.memory_space<vmem>>, %arg9: memref<1x16xf32, #tpu.memory_space<vmem>>, %arg10: memref<4x8x16xf32, #tpu.memory_space<vmem>>, %arg11: memref<8x128xf32, #tpu.memory_space<vmem>>) attributes {dimension_semantics = [#tpu.dimension_semantics<parallel>], iteration_bounds = array<i64: 1>, scalar_prefetch = 0 : i64, scratch_operands = 0 : i64, tpu.core_type = #tpu.core_type<tc>, window_params = [{transform_indices = @transform_0, window_bounds = array<i64: 4, 8, 16>}, {pipeline_mode = #tpu.pipeline_mode<synchronous>, transform_indices = @transform_1, window_bounds = array<i64: 3, 16, 128>}, {pipeline_mode = #tpu.pipeline_mode<synchronous>, transform_indices = @transform_2, window_bounds = array<i64: 1, 128>}, {pipeline_mode = #tpu.pipeline_mode<synchronous>, transform_indices = @transform_3, window_bounds = array<i64: 3, 128, 128>}, {pipeline_mode = #tpu.pipeline_mode<synchronous>, transform_indices = @transform_4, window_bounds = array<i64: 1, 128>}, {pipeline_mode = #tpu.pipeline_mode<synchronous>, transform_indices = @transform_5, window_bounds = array<i64: 3, 128, 128>}, {pipeline_mode = #tpu.pipeline_mode<synchronous>, transform_indices = @transform_6, window_bounds = array<i64: 1, 128>}, {pipeline_mode = #tpu.pipeline_mode<synchronous>, transform_indices = @transform_7, window_bounds = array<i64: 3, 128, 16>}, {pipeline_mode = #tpu.pipeline_mode<synchronous>, transform_indices = @transform_8, window_bounds = array<i64: 1, 16>}, {transform_indices = @transform_9, window_bounds = array<i64: 4, 8, 16>}, {transform_indices = @transform_10, window_bounds = array<i64: 8, 128>}]} {
    %0 = tpu.iota {dimensions = array<i32: 0>} : vector<8x1xi32>
    %c4_i32 = arith.constant 4 : i32
    %c0_i32 = arith.constant 0 : i32
    %1 = arith.cmpi eq, %c4_i32, %c0_i32 : i32
    %c1_i32 = arith.constant 1 : i32
    %2 = arith.select %1, %c1_i32, %c4_i32 : i32
    %3 = vector.broadcast %2 : i32 to vector<8x1xi32>
    %4 = arith.remsi %0, %3 : vector<8x1xi32>
    %c0_i32_0 = arith.constant 0 : i32
    %5 = vector.broadcast %c0_i32_0 : i32 to vector<8x1xi32>
    %6 = arith.cmpi ne, %4, %5 : vector<8x1xi32>
    %c0_i32_1 = arith.constant 0 : i32
    %7 = vector.broadcast %c0_i32_1 : i32 to vector<8x1xi32>
    %8 = arith.cmpi slt, %4, %7 : vector<8x1xi32>
    %c0_i32_2 = arith.constant 0 : i32
    %9 = arith.cmpi slt, %2, %c0_i32_2 : i32
    %10 = vector.broadcast %9 : i1 to vector<8x1xi1>
    %11 = vector.broadcast %10 : vector<8x1xi1> to vector<8x1xi1>
    %12 = arith.xori %8, %11 : vector<8x1xi1>
    %13 = arith.andi %12, %6 : vector<8x1xi1>
    %14 = vector.broadcast %2 : i32 to vector<8x1xi32>
    %15 = arith.addi %4, %14 : vector<8x1xi32>
    %16 = arith.select %13, %15, %4 : vector<8x1xi1>, vector<8x1xi32>
    %c0_i32_3 = arith.constant 0 : i32
    %17 = vector.broadcast %c0_i32_3 : i32 to vector<8x1xi32>
    %18 = arith.cmpi eq, %16, %17 : vector<8x1xi32>
    %c4_i32_4 = arith.constant 4 : i32
    %c0_i32_5 = arith.constant 0 : i32
    %19 = arith.cmpi eq, %c4_i32_4, %c0_i32_5 : i32
    %c1_i32_6 = arith.constant 1 : i32
    %20 = arith.select %19, %c1_i32_6, %c4_i32_4 : i32
    %21 = vector.broadcast %20 : i32 to vector<8x1xi32>
    %22 = arith.remsi %0, %21 : vector<8x1xi32>
    %c0_i32_7 = arith.constant 0 : i32
    %23 = vector.broadcast %c0_i32_7 : i32 to vector<8x1xi32>
    %24 = arith.cmpi ne, %22, %23 : vector<8x1xi32>
    %c0_i32_8 = arith.constant 0 : i32
    %25 = vector.broadcast %c0_i32_8 : i32 to vector<8x1xi32>
    %26 = arith.cmpi slt, %22, %25 : vector<8x1xi32>
    %c0_i32_9 = arith.constant 0 : i32
    %27 = arith.cmpi slt, %20, %c0_i32_9 : i32
    %28 = vector.broadcast %27 : i1 to vector<8x1xi1>
    %29 = vector.broadcast %28 : vector<8x1xi1> to vector<8x1xi1>
    %30 = arith.xori %26, %29 : vector<8x1xi1>
    %31 = arith.andi %30, %24 : vector<8x1xi1>
    %32 = vector.broadcast %20 : i32 to vector<8x1xi32>
    %33 = arith.addi %22, %32 : vector<8x1xi32>
    %34 = arith.select %31, %33, %22 : vector<8x1xi1>, vector<8x1xi32>
    %c3_i32 = arith.constant 3 : i32
    %35 = vector.broadcast %c3_i32 : i32 to vector<8x1xi32>
    %36 = arith.cmpi eq, %34, %35 : vector<8x1xi32>
    %c0 = arith.constant 0 : index
    %c0_10 = arith.constant 0 : index
    %c0_11 = arith.constant 0 : index
    %37 = vector.load %arg1[%c0, %c0_10, %c0_11] : memref<4x8x16xbf16, #tpu.memory_space<vmem>>, vector<1x8x16xbf16>
    %38 = vector.shape_cast %37 : vector<1x8x16xbf16> to vector<8x16xbf16>
    %c1 = arith.constant 1 : index
    %c0_12 = arith.constant 0 : index
    %c0_13 = arith.constant 0 : index
    %39 = vector.load %arg1[%c1, %c0_12, %c0_13] : memref<4x8x16xbf16, #tpu.memory_space<vmem>>, vector<1x8x16xbf16>
    %40 = vector.shape_cast %39 : vector<1x8x16xbf16> to vector<8x16xbf16>
    %c2 = arith.constant 2 : index
    %c0_14 = arith.constant 0 : index
    %c0_15 = arith.constant 0 : index
    %41 = vector.load %arg1[%c2, %c0_14, %c0_15] : memref<4x8x16xbf16, #tpu.memory_space<vmem>>, vector<1x8x16xbf16>
    %42 = vector.shape_cast %41 : vector<1x8x16xbf16> to vector<8x16xbf16>
    %c3 = arith.constant 3 : index
    %c0_16 = arith.constant 0 : index
    %c0_17 = arith.constant 0 : index
    %43 = vector.load %arg1[%c3, %c0_16, %c0_17] : memref<4x8x16xbf16, #tpu.memory_space<vmem>>, vector<1x8x16xbf16>
    %44 = vector.shape_cast %43 : vector<1x8x16xbf16> to vector<8x16xbf16>
    %c0_18 = arith.constant 0 : index
    %c0_19 = arith.constant 0 : index
    %45 = vector.load %arg3[%c0_18, %c0_19] : memref<1x128xf32, #tpu.memory_space<vmem>>, vector<1x128xf32>
    %46 = arith.extf %44 : vector<8x16xbf16> to vector<8x16xf32>
    %c1_i32_20 = arith.constant 1 : i32
    %47 = tpu.dynamic_rotate %46 by %c1_i32_20 dim 0 : vector<8x16xf32>, i32 -> vector<8x16xf32>
    %cst = arith.constant 0.000000e+00 : f32
    %48 = vector.shape_cast %18 : vector<8x1xi1> to vector<8x1xi1>
    %49 = vector.broadcast %48 : vector<8x1xi1> to vector<8x16xi1>
    %50 = vector.broadcast %cst : f32 to vector<8x16xf32>
    %51 = arith.select %49, %50, %47 : vector<8x16xi1>, vector<8x16xf32>
    %52 = arith.truncf %51 : vector<8x16xf32> to vector<8x16xbf16>
    %c0_21 = arith.constant 0 : index
    %c0_22 = arith.constant 0 : index
    %c0_23 = arith.constant 0 : index
    %53 = vector.load %arg2[%c0_21, %c0_22, %c0_23] : memref<3x16x128xbf16, #tpu.memory_space<vmem>>, vector<1x16x128xbf16>
    %54 = vector.shape_cast %53 : vector<1x16x128xbf16> to vector<16x128xbf16>
    %cst_24 = arith.constant dense<0.000000e+00> : vector<8x128xf32>
    %55 = tpu.matmul %52, %54, %cst_24 {dimension_numbers = #tpu.dot_dimension_numbers<[1], [0], [0], [1], [0, 0, 1, 1], [], []>} : vector<8x16xbf16>, vector<16x128xbf16>, vector<8x128xf32> -> vector<8x128xf32>
    %c1_25 = arith.constant 1 : index
    %c0_26 = arith.constant 0 : index
    %c0_27 = arith.constant 0 : index
    %56 = vector.load %arg2[%c1_25, %c0_26, %c0_27] : memref<3x16x128xbf16, #tpu.memory_space<vmem>>, vector<1x16x128xbf16>
    %57 = vector.shape_cast %56 : vector<1x16x128xbf16> to vector<16x128xbf16>
    %cst_28 = arith.constant dense<0.000000e+00> : vector<8x128xf32>
    %58 = tpu.matmul %38, %57, %cst_28 {dimension_numbers = #tpu.dot_dimension_numbers<[1], [0], [0], [1], [0, 0, 1, 1], [], []>} : vector<8x16xbf16>, vector<16x128xbf16>, vector<8x128xf32> -> vector<8x128xf32>
    %59 = arith.addf %55, %58 : vector<8x128xf32>
    %c2_29 = arith.constant 2 : index
    %c0_30 = arith.constant 0 : index
    %c0_31 = arith.constant 0 : index
    %60 = vector.load %arg2[%c2_29, %c0_30, %c0_31] : memref<3x16x128xbf16, #tpu.memory_space<vmem>>, vector<1x16x128xbf16>
    %61 = vector.shape_cast %60 : vector<1x16x128xbf16> to vector<16x128xbf16>
    %cst_32 = arith.constant dense<0.000000e+00> : vector<8x128xf32>
    %62 = tpu.matmul %40, %61, %cst_32 {dimension_numbers = #tpu.dot_dimension_numbers<[1], [0], [0], [1], [0, 0, 1, 1], [], []>} : vector<8x16xbf16>, vector<16x128xbf16>, vector<8x128xf32> -> vector<8x128xf32>
    %63 = arith.addf %59, %62 : vector<8x128xf32>
    %64 = vector.broadcast %45 : vector<1x128xf32> to vector<8x128xf32>
    %65 = arith.addf %63, %64 : vector<8x128xf32>
    %cst_33 = arith.constant 0.000000e+00 : f32
    %66 = vector.broadcast %cst_33 : f32 to vector<8x128xf32>
    %67 = arith.maximumf %65, %66 : vector<8x128xf32>
    %c0_34 = arith.constant 0 : index
    %c0_35 = arith.constant 0 : index
    %c0_36 = arith.constant 0 : index
    %68 = vector.load %arg2[%c0_34, %c0_35, %c0_36] : memref<3x16x128xbf16, #tpu.memory_space<vmem>>, vector<1x16x128xbf16>
    %69 = vector.shape_cast %68 : vector<1x16x128xbf16> to vector<16x128xbf16>
    %cst_37 = arith.constant dense<0.000000e+00> : vector<8x128xf32>
    %70 = tpu.matmul %40, %69, %cst_37 {dimension_numbers = #tpu.dot_dimension_numbers<[1], [0], [0], [1], [0, 0, 1, 1], [], []>} : vector<8x16xbf16>, vector<16x128xbf16>, vector<8x128xf32> -> vector<8x128xf32>
    %c1_38 = arith.constant 1 : index
    %c0_39 = arith.constant 0 : index
    %c0_40 = arith.constant 0 : index
    %71 = vector.load %arg2[%c1_38, %c0_39, %c0_40] : memref<3x16x128xbf16, #tpu.memory_space<vmem>>, vector<1x16x128xbf16>
    %72 = vector.shape_cast %71 : vector<1x16x128xbf16> to vector<16x128xbf16>
    %cst_41 = arith.constant dense<0.000000e+00> : vector<8x128xf32>
    %73 = tpu.matmul %42, %72, %cst_41 {dimension_numbers = #tpu.dot_dimension_numbers<[1], [0], [0], [1], [0, 0, 1, 1], [], []>} : vector<8x16xbf16>, vector<16x128xbf16>, vector<8x128xf32> -> vector<8x128xf32>
    %74 = arith.addf %70, %73 : vector<8x128xf32>
    %c2_42 = arith.constant 2 : index
    %c0_43 = arith.constant 0 : index
    %c0_44 = arith.constant 0 : index
    %75 = vector.load %arg2[%c2_42, %c0_43, %c0_44] : memref<3x16x128xbf16, #tpu.memory_space<vmem>>, vector<1x16x128xbf16>
    %76 = vector.shape_cast %75 : vector<1x16x128xbf16> to vector<16x128xbf16>
    %cst_45 = arith.constant dense<0.000000e+00> : vector<8x128xf32>
    %77 = tpu.matmul %44, %76, %cst_45 {dimension_numbers = #tpu.dot_dimension_numbers<[1], [0], [0], [1], [0, 0, 1, 1], [], []>} : vector<8x16xbf16>, vector<16x128xbf16>, vector<8x128xf32> -> vector<8x128xf32>
    %78 = arith.addf %74, %77 : vector<8x128xf32>
    %79 = vector.broadcast %45 : vector<1x128xf32> to vector<8x128xf32>
    %80 = arith.addf %78, %79 : vector<8x128xf32>
    %cst_46 = arith.constant 0.000000e+00 : f32
    %81 = vector.broadcast %cst_46 : f32 to vector<8x128xf32>
    %82 = arith.maximumf %80, %81 : vector<8x128xf32>
    %c1_i32_47 = arith.constant 1 : i32
    %83 = tpu.dynamic_rotate %82 by %c1_i32_47 dim 0 : vector<8x128xf32>, i32 -> vector<8x128xf32>
    %cst_48 = arith.constant 0.000000e+00 : f32
    %84 = vector.shape_cast %18 : vector<8x1xi1> to vector<8x1xi1>
    %85 = vector.broadcast %84 : vector<8x1xi1> to vector<8x128xi1>
    %86 = vector.broadcast %cst_48 : f32 to vector<8x128xf32>
    %87 = arith.select %85, %86, %83 : vector<8x128xi1>, vector<8x128xf32>
    %88 = arith.truncf %87 : vector<8x128xf32> to vector<8x128xbf16>
    %c0_49 = arith.constant 0 : index
    %c0_50 = arith.constant 0 : index
    %c0_51 = arith.constant 0 : index
    %89 = vector.load %arg4[%c0_49, %c0_50, %c0_51] : memref<3x128x128xbf16, #tpu.memory_space<vmem>>, vector<1x128x128xbf16>
    %90 = vector.shape_cast %89 : vector<1x128x128xbf16> to vector<128x128xbf16>
    %cst_52 = arith.constant dense<0.000000e+00> : vector<8x128xf32>
    %91 = tpu.matmul %88, %90, %cst_52 {dimension_numbers = #tpu.dot_dimension_numbers<[1], [0], [0], [1], [0, 0, 1, 1], [], []>} : vector<8x128xbf16>, vector<128x128xbf16>, vector<8x128xf32> -> vector<8x128xf32>
    %92 = arith.truncf %67 : vector<8x128xf32> to vector<8x128xbf16>
    %c1_53 = arith.constant 1 : index
    %c0_54 = arith.constant 0 : index
    %c0_55 = arith.constant 0 : index
    %93 = vector.load %arg4[%c1_53, %c0_54, %c0_55] : memref<3x128x128xbf16, #tpu.memory_space<vmem>>, vector<1x128x128xbf16>
    %94 = vector.shape_cast %93 : vector<1x128x128xbf16> to vector<128x128xbf16>
    %cst_56 = arith.constant dense<0.000000e+00> : vector<8x128xf32>
    %95 = tpu.matmul %92, %94, %cst_56 {dimension_numbers = #tpu.dot_dimension_numbers<[1], [0], [0], [1], [0, 0, 1, 1], [], []>} : vector<8x128xbf16>, vector<128x128xbf16>, vector<8x128xf32> -> vector<8x128xf32>
    %96 = arith.addf %91, %95 : vector<8x128xf32>
    %97 = arith.truncf %82 : vector<8x128xf32> to vector<8x128xbf16>
    %c2_57 = arith.constant 2 : index
    %c0_58 = arith.constant 0 : index
    %c0_59 = arith.constant 0 : index
    %98 = vector.load %arg4[%c2_57, %c0_58, %c0_59] : memref<3x128x128xbf16, #tpu.memory_space<vmem>>, vector<1x128x128xbf16>
    %99 = vector.shape_cast %98 : vector<1x128x128xbf16> to vector<128x128xbf16>
    %cst_60 = arith.constant dense<0.000000e+00> : vector<8x128xf32>
    %100 = tpu.matmul %97, %99, %cst_60 {dimension_numbers = #tpu.dot_dimension_numbers<[1], [0], [0], [1], [0, 0, 1, 1], [], []>} : vector<8x128xbf16>, vector<128x128xbf16>, vector<8x128xf32> -> vector<8x128xf32>
    %101 = arith.addf %96, %100 : vector<8x128xf32>
    %c0_61 = arith.constant 0 : index
    %c0_62 = arith.constant 0 : index
    %102 = vector.load %arg5[%c0_61, %c0_62] : memref<1x128xf32, #tpu.memory_space<vmem>>, vector<1x128xf32>
    %103 = vector.broadcast %102 : vector<1x128xf32> to vector<8x128xf32>
    %104 = arith.addf %101, %103 : vector<8x128xf32>
    %cst_63 = arith.constant 0.000000e+00 : f32
    %105 = vector.broadcast %cst_63 : f32 to vector<8x128xf32>
    %106 = arith.maximumf %104, %105 : vector<8x128xf32>
    %c0_64 = arith.constant 0 : index
    %c0_65 = arith.constant 0 : index
    %107 = vector.load %arg11[%c0_64, %c0_65] : memref<8x128xf32, #tpu.memory_space<vmem>>, vector<8x128xf32>
    tpu.vector_store %arg11[%c0_64, %c0_65], %106 {strides = array<i32>} : memref<8x128xf32, #tpu.memory_space<vmem>>, vector<8x128xf32>,
    %c0_66 = arith.constant 0 : index
    %c0_67 = arith.constant 0 : index
    %108 = vector.load %arg7[%c0_66, %c0_67] : memref<1x128xf32, #tpu.memory_space<vmem>>, vector<1x128xf32>
    %109 = arith.truncf %106 : vector<8x128xf32> to vector<8x128xbf16>
    %c1_68 = arith.constant 1 : index
    %c0_69 = arith.constant 0 : index
    %c0_70 = arith.constant 0 : index
    %110 = vector.load %arg6[%c1_68, %c0_69, %c0_70] : memref<3x128x128xbf16, #tpu.memory_space<vmem>>, vector<1x128x128xbf16>
    %111 = vector.shape_cast %110 : vector<1x128x128xbf16> to vector<128x128xbf16>
    %cst_71 = arith.constant dense<0.000000e+00> : vector<8x128xf32>
    %112 = tpu.matmul %109, %111, %cst_71 {dimension_numbers = #tpu.dot_dimension_numbers<[1], [0], [0], [1], [0, 0, 1, 1], [], []>} : vector<8x128xbf16>, vector<128x128xbf16>, vector<8x128xf32> -> vector<8x128xf32>
    %113 = vector.broadcast %108 : vector<1x128xf32> to vector<8x128xf32>
    %114 = arith.addf %112, %113 : vector<8x128xf32>
    %cst_72 = arith.constant 0.000000e+00 : f32
    %115 = vector.broadcast %cst_72 : f32 to vector<8x128xf32>
    %116 = arith.maximumf %114, %115 : vector<8x128xf32>
    %117 = arith.truncf %106 : vector<8x128xf32> to vector<8x128xbf16>
    %c2_73 = arith.constant 2 : index
    %c0_74 = arith.constant 0 : index
    %c0_75 = arith.constant 0 : index
    %118 = vector.load %arg6[%c2_73, %c0_74, %c0_75] : memref<3x128x128xbf16, #tpu.memory_space<vmem>>, vector<1x128x128xbf16>
    %119 = vector.shape_cast %118 : vector<1x128x128xbf16> to vector<128x128xbf16>
    %cst_76 = arith.constant dense<0.000000e+00> : vector<8x128xf32>
    %120 = tpu.matmul %117, %119, %cst_76 {dimension_numbers = #tpu.dot_dimension_numbers<[1], [0], [0], [1], [0, 0, 1, 1], [], []>} : vector<8x128xbf16>, vector<128x128xbf16>, vector<8x128xf32> -> vector<8x128xf32>
    %c7_i32 = arith.constant 7 : i32
    %121 = tpu.dynamic_rotate %106 by %c7_i32 dim 0 : vector<8x128xf32>, i32 -> vector<8x128xf32>
    %cst_77 = arith.constant 0.000000e+00 : f32
    %122 = vector.shape_cast %36 : vector<8x1xi1> to vector<8x1xi1>
    %123 = vector.broadcast %122 : vector<8x1xi1> to vector<8x128xi1>
    %124 = vector.broadcast %cst_77 : f32 to vector<8x128xf32>
    %125 = arith.select %123, %124, %121 : vector<8x128xi1>, vector<8x128xf32>
    %126 = arith.truncf %125 : vector<8x128xf32> to vector<8x128xbf16>
    %c0_78 = arith.constant 0 : index
    %c0_79 = arith.constant 0 : index
    %c0_80 = arith.constant 0 : index
    %127 = vector.load %arg6[%c0_78, %c0_79, %c0_80] : memref<3x128x128xbf16, #tpu.memory_space<vmem>>, vector<1x128x128xbf16>
    %128 = vector.shape_cast %127 : vector<1x128x128xbf16> to vector<128x128xbf16>
    %cst_81 = arith.constant dense<0.000000e+00> : vector<8x128xf32>
    %129 = tpu.matmul %126, %128, %cst_81 {dimension_numbers = #tpu.dot_dimension_numbers<[1], [0], [0], [1], [0, 0, 1, 1], [], []>} : vector<8x128xbf16>, vector<128x128xbf16>, vector<8x128xf32> -> vector<8x128xf32>
    %130 = arith.addf %120, %129 : vector<8x128xf32>
    %131 = vector.broadcast %108 : vector<1x128xf32> to vector<8x128xf32>
    %132 = arith.addf %130, %131 : vector<8x128xf32>
    %cst_82 = arith.constant 0.000000e+00 : f32
    %133 = vector.broadcast %cst_82 : f32 to vector<8x128xf32>
    %134 = arith.maximumf %132, %133 : vector<8x128xf32>
    %c0_83 = arith.constant 0 : index
    %c0_84 = arith.constant 0 : index
    %135 = vector.load %arg9[%c0_83, %c0_84] : memref<1x16xf32, #tpu.memory_space<vmem>>, vector<1x16xf32>
    %136 = arith.truncf %116 : vector<8x128xf32> to vector<8x128xbf16>
    %c1_85 = arith.constant 1 : index
    %c0_86 = arith.constant 0 : index
    %c0_87 = arith.constant 0 : index
    %137 = vector.load %arg8[%c1_85, %c0_86, %c0_87] : memref<3x128x16xbf16, #tpu.memory_space<vmem>>, vector<1x128x16xbf16>
    %138 = vector.shape_cast %137 : vector<1x128x16xbf16> to vector<128x16xbf16>
    %cst_88 = arith.constant dense<0.000000e+00> : vector<8x16xf32>
    %139 = tpu.matmul %136, %138, %cst_88 {dimension_numbers = #tpu.dot_dimension_numbers<[1], [0], [0], [1], [0, 0, 1, 1], [], []>} : vector<8x128xbf16>, vector<128x16xbf16>, vector<8x16xf32> -> vector<8x16xf32>
    %140 = vector.broadcast %135 : vector<1x16xf32> to vector<8x16xf32>
    %141 = arith.addf %139, %140 : vector<8x16xf32>
    %142 = arith.truncf %116 : vector<8x128xf32> to vector<8x128xbf16>
    %c2_89 = arith.constant 2 : index
    %c0_90 = arith.constant 0 : index
    %c0_91 = arith.constant 0 : index
    %143 = vector.load %arg8[%c2_89, %c0_90, %c0_91] : memref<3x128x16xbf16, #tpu.memory_space<vmem>>, vector<1x128x16xbf16>
    %144 = vector.shape_cast %143 : vector<1x128x16xbf16> to vector<128x16xbf16>
    %cst_92 = arith.constant dense<0.000000e+00> : vector<8x16xf32>
    %145 = tpu.matmul %142, %144, %cst_92 {dimension_numbers = #tpu.dot_dimension_numbers<[1], [0], [0], [1], [0, 0, 1, 1], [], []>} : vector<8x128xbf16>, vector<128x16xbf16>, vector<8x16xf32> -> vector<8x16xf32>
    %146 = arith.truncf %134 : vector<8x128xf32> to vector<8x128xbf16>
    %c0_93 = arith.constant 0 : index
    %c0_94 = arith.constant 0 : index
    %c0_95 = arith.constant 0 : index
    %147 = vector.load %arg8[%c0_93, %c0_94, %c0_95] : memref<3x128x16xbf16, #tpu.memory_space<vmem>>, vector<1x128x16xbf16>
    %148 = vector.shape_cast %147 : vector<1x128x16xbf16> to vector<128x16xbf16>
    %cst_96 = arith.constant dense<0.000000e+00> : vector<8x16xf32>
    %149 = tpu.matmul %146, %148, %cst_96 {dimension_numbers = #tpu.dot_dimension_numbers<[1], [0], [0], [1], [0, 0, 1, 1], [], []>} : vector<8x128xbf16>, vector<128x16xbf16>, vector<8x16xf32> -> vector<8x16xf32>
    %150 = arith.addf %145, %149 : vector<8x16xf32>
    %151 = vector.broadcast %135 : vector<1x16xf32> to vector<8x16xf32>
    %152 = arith.addf %150, %151 : vector<8x16xf32>
    %153 = arith.truncf %134 : vector<8x128xf32> to vector<8x128xbf16>
    %c1_97 = arith.constant 1 : index
    %c0_98 = arith.constant 0 : index
    %c0_99 = arith.constant 0 : index
    %154 = vector.load %arg8[%c1_97, %c0_98, %c0_99] : memref<3x128x16xbf16, #tpu.memory_space<vmem>>, vector<1x128x16xbf16>
    %155 = vector.shape_cast %154 : vector<1x128x16xbf16> to vector<128x16xbf16>
    %cst_100 = arith.constant dense<0.000000e+00> : vector<8x16xf32>
    %156 = tpu.matmul %153, %155, %cst_100 {dimension_numbers = #tpu.dot_dimension_numbers<[1], [0], [0], [1], [0, 0, 1, 1], [], []>} : vector<8x128xbf16>, vector<128x16xbf16>, vector<8x16xf32> -> vector<8x16xf32>
    %157 = vector.broadcast %135 : vector<1x16xf32> to vector<8x16xf32>
    %158 = arith.addf %156, %157 : vector<8x16xf32>
    %159 = arith.truncf %134 : vector<8x128xf32> to vector<8x128xbf16>
    %c2_101 = arith.constant 2 : index
    %c0_102 = arith.constant 0 : index
    %c0_103 = arith.constant 0 : index
    %160 = vector.load %arg8[%c2_101, %c0_102, %c0_103] : memref<3x128x16xbf16, #tpu.memory_space<vmem>>, vector<1x128x16xbf16>
    %161 = vector.shape_cast %160 : vector<1x128x16xbf16> to vector<128x16xbf16>
    %cst_104 = arith.constant dense<0.000000e+00> : vector<8x16xf32>
    %162 = tpu.matmul %159, %161, %cst_104 {dimension_numbers = #tpu.dot_dimension_numbers<[1], [0], [0], [1], [0, 0, 1, 1], [], []>} : vector<8x128xbf16>, vector<128x16xbf16>, vector<8x16xf32> -> vector<8x16xf32>
    %c7_i32_105 = arith.constant 7 : i32
    %163 = tpu.dynamic_rotate %116 by %c7_i32_105 dim 0 : vector<8x128xf32>, i32 -> vector<8x128xf32>
    %cst_106 = arith.constant 0.000000e+00 : f32
    %164 = vector.shape_cast %36 : vector<8x1xi1> to vector<8x1xi1>
    %165 = vector.broadcast %164 : vector<8x1xi1> to vector<8x128xi1>
    %166 = vector.broadcast %cst_106 : f32 to vector<8x128xf32>
    %167 = arith.select %165, %166, %163 : vector<8x128xi1>, vector<8x128xf32>
    %168 = arith.truncf %167 : vector<8x128xf32> to vector<8x128xbf16>
    %c0_107 = arith.constant 0 : index
    %c0_108 = arith.constant 0 : index
    %c0_109 = arith.constant 0 : index
    %169 = vector.load %arg8[%c0_107, %c0_108, %c0_109] : memref<3x128x16xbf16, #tpu.memory_space<vmem>>, vector<1x128x16xbf16>
    %170 = vector.shape_cast %169 : vector<1x128x16xbf16> to vector<128x16xbf16>
    %cst_110 = arith.constant dense<0.000000e+00> : vector<8x16xf32>
    %171 = tpu.matmul %168, %170, %cst_110 {dimension_numbers = #tpu.dot_dimension_numbers<[1], [0], [0], [1], [0, 0, 1, 1], [], []>} : vector<8x128xbf16>, vector<128x16xbf16>, vector<8x16xf32> -> vector<8x16xf32>
    %172 = arith.addf %162, %171 : vector<8x16xf32>
    %173 = vector.broadcast %135 : vector<1x16xf32> to vector<8x16xf32>
    %174 = arith.addf %172, %173 : vector<8x16xf32>
    %175 = arith.negf %141 : vector<8x16xf32>
    %176 = math.exp %175 : vector<8x16xf32>
    %cst_111 = arith.constant 1.000000e+00 : f32
    %177 = vector.broadcast %cst_111 : f32 to vector<8x16xf32>
    %178 = arith.addf %177, %176 : vector<8x16xf32>
    %179 = arith.divf %177, %178 : vector<8x16xf32>
    %c0_112 = arith.constant 0 : index
    %c0_113 = arith.constant 0 : index
    %c0_114 = arith.constant 0 : index
    %180 = vector.load %arg10[%c0_112, %c0_113, %c0_114] : memref<4x8x16xf32, #tpu.memory_space<vmem>>, vector<1x8x16xf32>
    %181 = vector.shape_cast %180 : vector<1x8x16xf32> to vector<8x16xf32>
    %182 = vector.shape_cast %179 : vector<8x16xf32> to vector<1x8x16xf32>
    tpu.vector_store %arg10[%c0_112, %c0_113, %c0_114], %182 {strides = array<i32>} : memref<4x8x16xf32, #tpu.memory_space<vmem>>, vector<1x8x16xf32>,
    %183 = arith.negf %152 : vector<8x16xf32>
    %184 = math.exp %183 : vector<8x16xf32>
    %cst_115 = arith.constant 1.000000e+00 : f32
    %185 = vector.broadcast %cst_115 : f32 to vector<8x16xf32>
    %186 = arith.addf %185, %184 : vector<8x16xf32>
    %187 = arith.divf %185, %186 : vector<8x16xf32>
    %c1_116 = arith.constant 1 : index
    %c0_117 = arith.constant 0 : index
    %c0_118 = arith.constant 0 : index
    %188 = vector.load %arg10[%c1_116, %c0_117, %c0_118] : memref<4x8x16xf32, #tpu.memory_space<vmem>>, vector<1x8x16xf32>
    %189 = vector.shape_cast %188 : vector<1x8x16xf32> to vector<8x16xf32>
    %190 = vector.shape_cast %187 : vector<8x16xf32> to vector<1x8x16xf32>
    tpu.vector_store %arg10[%c1_116, %c0_117, %c0_118], %190 {strides = array<i32>} : memref<4x8x16xf32, #tpu.memory_space<vmem>>, vector<1x8x16xf32>,
    %191 = arith.negf %158 : vector<8x16xf32>
    %192 = math.exp %191 : vector<8x16xf32>
    %cst_119 = arith.constant 1.000000e+00 : f32
    %193 = vector.broadcast %cst_119 : f32 to vector<8x16xf32>
    %194 = arith.addf %193, %192 : vector<8x16xf32>
    %195 = arith.divf %193, %194 : vector<8x16xf32>
    %c2_120 = arith.constant 2 : index
    %c0_121 = arith.constant 0 : index
    %c0_122 = arith.constant 0 : index
    %196 = vector.load %arg10[%c2_120, %c0_121, %c0_122] : memref<4x8x16xf32, #tpu.memory_space<vmem>>, vector<1x8x16xf32>
    %197 = vector.shape_cast %196 : vector<1x8x16xf32> to vector<8x16xf32>
    %198 = vector.shape_cast %195 : vector<8x16xf32> to vector<1x8x16xf32>
    tpu.vector_store %arg10[%c2_120, %c0_121, %c0_122], %198 {strides = array<i32>} : memref<4x8x16xf32, #tpu.memory_space<vmem>>, vector<1x8x16xf32>,
    %199 = arith.negf %174 : vector<8x16xf32>
    %200 = math.exp %199 : vector<8x16xf32>
    %cst_123 = arith.constant 1.000000e+00 : f32
    %201 = vector.broadcast %cst_123 : f32 to vector<8x16xf32>
    %202 = arith.addf %201, %200 : vector<8x16xf32>
    %203 = arith.divf %201, %202 : vector<8x16xf32>
    %c3_124 = arith.constant 3 : index
    %c0_125 = arith.constant 0 : index
    %c0_126 = arith.constant 0 : index
    %204 = vector.load %arg10[%c3_124, %c0_125, %c0_126] : memref<4x8x16xf32, #tpu.memory_space<vmem>>, vector<1x8x16xf32>
    %205 = vector.shape_cast %204 : vector<1x8x16xf32> to vector<8x16xf32>
    %206 = vector.shape_cast %203 : vector<8x16xf32> to vector<1x8x16xf32>
    tpu.vector_store %arg10[%c3_124, %c0_125, %c0_126], %206 {strides = array<i32>} : memref<4x8x16xf32, #tpu.memory_space<vmem>>, vector<1x8x16xf32>,
    return
  }
  func.func @transform_0(%arg0: i32) -> (i32, i32, i32) {
    %c0_i32 = arith.constant 0 : i32
    %c0_i32_0 = arith.constant 0 : i32
    %c0_i32_1 = arith.constant 0 : i32
    return %c0_i32, %arg0, %c0_i32_0 : i32, i32, i32
  }
  func.func @transform_1(%arg0: i32) -> (i32, i32, i32) {
    %c0_i32 = arith.constant 0 : i32
    %c0_i32_0 = arith.constant 0 : i32
    %c0_i32_1 = arith.constant 0 : i32
    %c0_i32_2 = arith.constant 0 : i32
    return %c0_i32, %c0_i32_0, %c0_i32_1 : i32, i32, i32
  }
  func.func @transform_2(%arg0: i32) -> (i32, i32) {
    %c0_i32 = arith.constant 0 : i32
    %c0_i32_0 = arith.constant 0 : i32
    %c0_i32_1 = arith.constant 0 : i32
    return %c0_i32, %c0_i32_0 : i32, i32
  }
  func.func @transform_3(%arg0: i32) -> (i32, i32, i32) {
    %c0_i32 = arith.constant 0 : i32
    %c0_i32_0 = arith.constant 0 : i32
    %c0_i32_1 = arith.constant 0 : i32
    %c0_i32_2 = arith.constant 0 : i32
    return %c0_i32, %c0_i32_0, %c0_i32_1 : i32, i32, i32
  }
  func.func @transform_4(%arg0: i32) -> (i32, i32) {
    %c0_i32 = arith.constant 0 : i32
    %c0_i32_0 = arith.constant 0 : i32
    %c0_i32_1 = arith.constant 0 : i32
    return %c0_i32, %c0_i32_0 : i32, i32
  }
  func.func @transform_5(%arg0: i32) -> (i32, i32, i32) {
    %c0_i32 = arith.constant 0 : i32
    %c0_i32_0 = arith.constant 0 : i32
    %c0_i32_1 = arith.constant 0 : i32
    %c0_i32_2 = arith.constant 0 : i32
    return %c0_i32, %c0_i32_0, %c0_i32_1 : i32, i32, i32
  }
  func.func @transform_6(%arg0: i32) -> (i32, i32) {
    %c0_i32 = arith.constant 0 : i32
    %c0_i32_0 = arith.constant 0 : i32
    %c0_i32_1 = arith.constant 0 : i32
    return %c0_i32, %c0_i32_0 : i32, i32
  }
  func.func @transform_7(%arg0: i32) -> (i32, i32, i32) {
    %c0_i32 = arith.constant 0 : i32
    %c0_i32_0 = arith.constant 0 : i32
    %c0_i32_1 = arith.constant 0 : i32
    %c0_i32_2 = arith.constant 0 : i32
    return %c0_i32, %c0_i32_0, %c0_i32_1 : i32, i32, i32
  }
  func.func @transform_8(%arg0: i32) -> (i32, i32) {
    %c0_i32 = arith.constant 0 : i32
    %c0_i32_0 = arith.constant 0 : i32
    %c0_i32_1 = arith.constant 0 : i32
    return %c0_i32, %c0_i32_0 : i32, i32
  }
  func.func @transform_9(%arg0: i32) -> (i32, i32, i32) {
    %c0_i32 = arith.constant 0 : i32
    %c0_i32_0 = arith.constant 0 : i32
    %c0_i32_1 = arith.constant 0 : i32
    return %c0_i32, %arg0, %c0_i32_0 : i32, i32, i32
  }
  func.func @transform_10(%arg0: i32) -> (i32, i32) {
    %c0_i32 = arith.constant 0 : i32
    %c0_i32_0 = arith.constant 0 : i32
    return %arg0, %c0_i32 : i32, i32
  }
}

</mosaic_0001>

<llo_original>
// kernel: ae_forward.1
$region0: #{ae_forward.1}
  #allocation0 [shape = 'u32[]', space=smem, size = 0x4, offset = 0x4, fixed_abs, tag = 'smem constant byte address 0x4 - core index']
  #allocation1 [shape = 'u32[144,128]{1,0:T(1,128)}', space=vmem, size = 0x12000, scoped, tag = 'internal scratch']
  %s0 = inlined_call_operand.vmem [shape: bf16[4,8,16], index: 0, kind: input, shape index: {}]
  %s1 = inlined_call_operand.vmem [shape: bf16[3,16,128], index: 1, kind: input, shape index: {}]
  %s2 = inlined_call_operand.vmem [shape: f32[1,128], index: 2, kind: input, shape index: {}]
  %s3 = inlined_call_operand.vmem [shape: bf16[3,128,128], index: 3, kind: input, shape index: {}]
  %s4 = inlined_call_operand.vmem [shape: f32[1,128], index: 4, kind: input, shape index: {}]
  %s5 = inlined_call_operand.hbm [shape: bf16[3,128,128], index: 5, kind: input, shape index: {}]
  %s6 = inlined_call_operand.vmem [shape: f32[1,128], index: 6, kind: input, shape index: {}]
  %s7 = inlined_call_operand.vmem [shape: bf16[3,128,16], index: 7, kind: input, shape index: {}]
  %s8 = inlined_call_operand.vmem [shape: f32[1,16], index: 8, kind: input, shape index: {}]
  %s9 = inlined_call_operand.vmem [shape: f32[4,8,16], index: 9, kind: output, shape index: {0}]
  %s10 = inlined_call_operand.vmem [shape: f32[8,128], index: 10, kind: output, shape index: {1}]
  %11 = xla_tuple %s9, %s10
  %s12 = sld [smem:[#allocation0]]
  $region58: #{ae_forward.1} parent=0
    _
  %s14 = ssub.s32 1, %s12
  %s15 = scalar_select 0, %s14, %s12
  $region1: #{ae_forward.1} parent=0
    #allocation2 [shape = 'u8[98304]{0}', space=vmem, size = 0x18000, scoped, tag = 'input window, operand 5, single buffered']
    #allocation3 [shape = 's32[1]{0}', space=sflag, size = 0x4, scoped, tag = 'scoped memory for ae_forward.1']
    %16 = vsyncpa [#allocation3], 0
    // Predicated region
    $region2: #{ae_forward.1} parent=1 // pred_check
      _
    $region3: #{ae_forward.1} parent=1 // pred_check_branch
      %18 = sbr.rel (0) target = $region5
    $region4: #{ae_forward.1} parent=1 // pred_region
      _
    $region5: #{ae_forward.1} parent=1 // pred_fallthru
      _
    // Predicated region
    $region6: #{ae_forward.1} parent=1 // pred_check
      _
    $region7: #{ae_forward.1} parent=1 // pred_check_branch
      %20 = sbr.rel (0) target = $region9
    $region8: #{ae_forward.1} parent=1 // pred_region
      _
    $region9: #{ae_forward.1} parent=1 // pred_fallthru
      _
    // Predicated region
    $region10: #{ae_forward.1} parent=1 // pred_check
      _
    $region11: #{ae_forward.1} parent=1 // pred_check_branch
      %22 = sbr.rel (0) target = $region13
    $region12: #{ae_forward.1} parent=1 // pred_region
      _
    $region13: #{ae_forward.1} parent=1 // pred_fallthru
      _
    // Predicated region
    $region14: #{ae_forward.1} parent=1 // pred_check
      _
    $region15: #{ae_forward.1} parent=1 // pred_check_branch
      %24 = sbr.rel (0) target = $region17
    $region16: #{ae_forward.1} parent=1 // pred_region
      _
    $region17: #{ae_forward.1} parent=1 // pred_fallthru
      _
    // Predicated region
    $region18: #{ae_forward.1} parent=1 // pred_check
      _
    $region19: #{ae_forward.1} parent=1 // pred_check_branch
      %26 = sbr.rel (0) target = $region21
    $region20: #{ae_forward.1} parent=1 // pred_region
      _
    $region21: #{ae_forward.1} parent=1 // pred_fallthru
      _
    // Predicated region
    $region22: #{ae_forward.1} parent=1 // pred_check
      _
    $region23: #{ae_forward.1} parent=1 // pred_check_branch
      %28 = sbr.rel (0) target = $region25
    $region24: #{ae_forward.1} parent=1 // pred_region
      %s30 = ssub.s32 3072, 3072
      %31 = vsyncadd [#allocation3], %s30
      %s32 = sshll.u32 [#allocation2], 4
      %s33 = int_to_ptr.vmem [resolvable:$true] %s32
      %38 = dma.hbm_to_vmem [thread:$0]  %s5, 3072, %s33, [#allocation3], 64, 64, 4
    $region25: #{ae_forward.1} parent=1 // pred_fallthru
      _
    // Predicated region
    $region26: #{ae_forward.1} parent=1 // pred_check
      _
    $region27: #{ae_forward.1} parent=1 // pred_check_branch
      %40 = sbr.rel (0) target = $region29
    $region28: #{ae_forward.1} parent=1 // pred_region
      _
    $region29: #{ae_forward.1} parent=1 // pred_fallthru
      _
    // Predicated region
    $region30: #{ae_forward.1} parent=1 // pred_check
      _
    $region31: #{ae_forward.1} parent=1 // pred_check_branch
      %42 = sbr.rel (0) target = $region33
    $region32: #{ae_forward.1} parent=1 // pred_region
      _
    $region33: #{ae_forward.1} parent=1 // pred_fallthru
      _
    // Predicated region
    $region34: #{ae_forward.1} parent=1 // pred_check
      _
    $region35: #{ae_forward.1} parent=1 // pred_check_branch
      %44 = sbr.rel (0) target = $region37
    $region36: #{ae_forward.1} parent=1 // pred_region
      _
    $region37: #{ae_forward.1} parent=1 // pred_fallthru
      _
    // Predicated region
    $region38: #{ae_forward.1} parent=1 // pred_check
      _
    $region39: #{ae_forward.1} parent=1 // pred_check_branch
      %46 = sbr.rel (0) target = $region41
    $region40: #{ae_forward.1} parent=1 // pred_region
      %47 = dma.done [#allocation3], 3072
    $region41: #{ae_forward.1} parent=1 // pred_fallthru
      _
    %v49 = vlaneseq
    %v50 = vshrl.u32 %v49, 7
    %vm51 = vcmp.lt.s32.totalorder %v50, 0
    %v52 = vsub.s32 0, %v50
    %v53 = vsel %vm51, %v52, %v50
    %v54 = vshrl.u32 %v53, 2
    %v55 = vand.u32 %v53, 3
    %v56 = vsub.s32 0, %v55
    %v57 = vsel %vm51, %v56, %v55
    %vm58 = vcmp.ne.s32.totalorder %v57, 0
    %vm59 = vcmp.lt.s32.totalorder %v57, 0
    %vm60 = vmand %vm59, %vm58
    %v61 = vadd.s32 %v57, 4
    %v62 = vsel %vm60, %v61, %v57
    %vm63 = vcmp.eq.s32.totalorder %v62, 0
    %vm64 = vcmp.eq.s32.totalorder %v62, 3
    %v65 = vld [vmem:[%s0] sm:$0xf]
    %s66 = scalar_lea.vmem %s0, 4
    %v67 = vld [vmem:[%s66] sm:$0xf]
    %s68 = scalar_lea.vmem %s0, 8
    %v69 = vld [vmem:[%s68] sm:$0xf]
    %s70 = scalar_lea.vmem %s0, 12
    %v71 = vld [vmem:[%s70] sm:$0xf]
    %v72 = vld [vmem:[%s2] sm:$0x1]
    %v73 = vunpack.c.l.bf16 %v71
    %v74 = vrot.slane %v73, 7
    %v75 = vsel %vm63, 1, 0
    %vm76 = vcmp.eq.s32.totalorder %v75, 1
    %v77 = vsel %vm76, 0.0, %v74
    %v78 = vpack.c.bf16 %v77, %v77
    %v79 = vld [vmem:[%s1] sm:$0xf]
    %v80 = vld [vmem:[%s1 + $0x4] sm:$0xf]
    %s81 = scalar_lea.vmem %s1, 8
    %v82 = vld [vmem:[%s81] sm:$0xf]
    %v83 = vld [vmem:[%s81 + $0x4] sm:$0xf]
    %v86 = vunpack.c.l.b16 %v82
    %v87 = vunpack.c.l.b16 %v83
    %v88 = vpack.c.b16 %v87, %v86
    %vm90 = vcmask 130048
    %v92 = vsel %vm90, %v65, 0
    %94 = vmatprep.subr.bf16.mxu0 0
    %95 = vmatpush1.bf16.msra.mxu0 0
    %96 = vmatprep.subr.bf16.mxu0 0
    %97 = vmatpush1.bf16.msra.mxu0 0
    %98 = vmatprep.subr.bf16.mxu0 0
    %99 = vmatpush1.bf16.msra.mxu0 0
    %100 = vmatprep.subr.bf16.mxu0 0
    %101 = vmatpush1.bf16.msra.mxu0 0
    %102 = vmatprep.subr.bf16.mxu0 0
    %103 = vmatpush1.bf16.msra.mxu0 0
    %104 = vmatprep.subr.bf16.mxu0 0
    %105 = vmatpush1.bf16.msra.mxu0 0
    %106 = vmatprep.subr.bf16.mxu0 0
    %107 = vmatpush1.bf16.msra.mxu0 0
    %108 = vmatprep.subr.bf16.mxu0 0
    %109 = vmatpush1.bf16.msra.mxu0 %v88
    %110 = vmatprep.subr.bf16.mxu0 0
    %111 = vmatpush2.bf16.msra.mxu0 0
    %112 = vmatprep.subr.bf16.mxu0 0
    %113 = vmatpush2.bf16.msra.mxu0 0
    %114 = vmatprep.subr.bf16.mxu0 0
    %115 = vmatpush2.bf16.msra.mxu0 0
    %116 = vmatprep.subr.bf16.mxu0 0
    %117 = vmatpush2.bf16.msra.mxu0 0
    %118 = vmatprep.subr.bf16.mxu0 0
    %119 = vmatpush2.bf16.msra.mxu0 0
    %120 = vmatprep.subr.bf16.mxu0 0
    %121 = vmatpush2.bf16.msra.mxu0 0
    %122 = vmatprep.subr.bf16.mxu0 0
    %123 = vmatpush2.bf16.msra.mxu0 0
    %124 = vmatprep.subr.bf16.mxu0 0
    %125 = vmatpush2.bf16.msra.mxu0 0
    %126 = vmatprep.mubr.bf16.mxu0 0
    %127 = vmatmul.mubr.bf16.gmra.mxu0 %v92
    %v128 = vpop.f32.mrf.mxu0
    %v129 = vadd.f32 0.0, %v128
    %v130 = vpop.f32.mrf.mxu0
    %v131 = vpop.f32.mrf.mxu0
    %v132 = vpop.f32.mrf.mxu0
    %133 = vdwg.mxu0
    %v136 = vunpack.c.l.b16 %v79
    %v137 = vunpack.c.l.b16 %v80
    %v138 = vpack.c.b16 %v137, %v136
    %v141 = vsel %vm90, %v78, 0
    %143 = vmatprep.subr.bf16.mxu0 0
    %144 = vmatpush1.bf16.msra.mxu0 0
    %145 = vmatprep.subr.bf16.mxu0 0
    %146 = vmatpush1.bf16.msra.mxu0 0
    %147 = vmatprep.subr.bf16.mxu0 0
    %148 = vmatpush1.bf16.msra.mxu0 0
    %149 = vmatprep.subr.bf16.mxu0 0
    %150 = vmatpush1.bf16.msra.mxu0 0
    %151 = vmatprep.subr.bf16.mxu0 0
    %152 = vmatpush1.bf16.msra.mxu0 0
    %153 = vmatprep.subr.bf16.mxu0 0
    %154 = vmatpush1.bf16.msra.mxu0 0
    %155 = vmatprep.subr.bf16.mxu0 0
    %156 = vmatpush1.bf16.msra.mxu0 0
    %157 = vmatprep.subr.bf16.mxu0 0
    %158 = vmatpush1.bf16.msra.mxu0 %v138
    %159 = vmatprep.subr.bf16.mxu0 0
    %160 = vmatpush2.bf16.msra.mxu0 0
    %161 = vmatprep.subr.bf16.mxu0 0
    %162 = vmatpush2.bf16.msra.mxu0 0
    %163 = vmatprep.subr.bf16.mxu0 0
    %164 = vmatpush2.bf16.msra.mxu0 0
    %165 = vmatprep.subr.bf16.mxu0 0
    %166 = vmatpush2.bf16.msra.mxu0 0
    %167 = vmatprep.subr.bf16.mxu0 0
    %168 = vmatpush2.bf16.msra.mxu0 0
    %169 = vmatprep.subr.bf16.mxu0 0
    %170 = vmatpush2.bf16.msra.mxu0 0
    %171 = vmatprep.subr.bf16.mxu0 0
    %172 = vmatpush2.bf16.msra.mxu0 0
    %173 = vmatprep.subr.bf16.mxu0 0
    %174 = vmatpush2.bf16.msra.mxu0 0
    %175 = vmatprep.mubr.bf16.mxu0 0
    %176 = vmatmul.mubr.bf16.gmra.mxu0 %v141
    %v177 = vpop.f32.mrf.mxu0
    %v178 = vadd.f32 %v129, %v177
    %v179 = vpop.f32.mrf.mxu0
    %v180 = vpop.f32.mrf.mxu0
    %v181 = vpop.f32.mrf.mxu0
    %182 = vdwg.mxu0
    %s183 = scalar_lea.vmem %s1, 16
    %v184 = vld [vmem:[%s183] sm:$0xf]
    %v185 = vld [vmem:[%s183 + $0x4] sm:$0xf]
    %v188 = vunpack.c.l.b16 %v184
    %v189 = vunpack.c.l.b16 %v185
    %v190 = vpack.c.b16 %v189, %v188
    %v193 = vsel %vm90, %v67, 0
    %195 = vmatprep.subr.bf16.mxu0 0
    %196 = vmatpush1.bf16.msra.mxu0 0
    %197 = vmatprep.subr.bf16.mxu0 0
    %198 = vmatpush1.bf16.msra.mxu0 0
    %199 = vmatprep.subr.bf16.mxu0 0
    %200 = vmatpush1.bf16.msra.mxu0 0
    %201 = vmatprep.subr.bf16.mxu0 0
    %202 = vmatpush1.bf16.msra.mxu0 0
    %203 = vmatprep.subr.bf16.mxu0 0
    %204 = vmatpush1.bf16.msra.mxu0 0
    %205 = vmatprep.subr.bf16.mxu0 0
    %206 = vmatpush1.bf16.msra.mxu0 0
    %207 = vmatprep.subr.bf16.mxu0 0
    %208 = vmatpush1.bf16.msra.mxu0 0
    %209 = vmatprep.subr.bf16.mxu0 0
    %210 = vmatpush1.bf16.msra.mxu0 %v190
    %211 = vmatprep.subr.bf16.mxu0 0
    %212 = vmatpush2.bf16.msra.mxu0 0
    %213 = vmatprep.subr.bf16.mxu0 0
    %214 = vmatpush2.bf16.msra.mxu0 0
    %215 = vmatprep.subr.bf16.mxu0 0
    %216 = vmatpush2.bf16.msra.mxu0 0
    %217 = vmatprep.subr.bf16.mxu0 0
    %218 = vmatpush2.bf16.msra.mxu0 0
    %219 = vmatprep.subr.bf16.mxu0 0
    %220 = vmatpush2.bf16.msra.mxu0 0
    %221 = vmatprep.subr.bf16.mxu0 0
    %222 = vmatpush2.bf16.msra.mxu0 0
    %223 = vmatprep.subr.bf16.mxu0 0
    %224 = vmatpush2.bf16.msra.mxu0 0
    %225 = vmatprep.subr.bf16.mxu0 0
    %226 = vmatpush2.bf16.msra.mxu0 0
    %227 = vmatprep.mubr.bf16.mxu0 0
    %228 = vmatmul.mubr.bf16.gmra.mxu0 %v193
    %v229 = vpop.f32.mrf.mxu0
    %v230 = vadd.f32 0.0, %v229
    %v231 = vpop.f32.mrf.mxu0
    %v232 = vpop.f32.mrf.mxu0
    %v233 = vpop.f32.mrf.mxu0
    %234 = vdwg.mxu0
    %v235 = vadd.f32 %v178, %v230
    %v237 = vlaneseq
    %v238 = vshrl.u32 %v237, 7
    %v239 = vsub.s32 0, %v238
    %v240 = vrot.slane %v72, %v239
    %v242 = vadd.f32 %v235, %v240
    %v243 = vmax.f32 %v242, 0.0
    %v245 = vsel %vm90, %v69, 0
    %247 = vmatprep.subr.bf16.mxu0 0
    %248 = vmatpush1.bf16.msra.mxu0 0
    %249 = vmatprep.subr.bf16.mxu0 0
    %250 = vmatpush1.bf16.msra.mxu0 0
    %251 = vmatprep.subr.bf16.mxu0 0
    %252 = vmatpush1.bf16.msra.mxu0 0
    %253 = vmatprep.subr.bf16.mxu0 0
    %254 = vmatpush1.bf16.msra.mxu0 0
    %255 = vmatprep.subr.bf16.mxu0 0
    %256 = vmatpush1.bf16.msra.mxu0 0
    %257 = vmatprep.subr.bf16.mxu0 0
    %258 = vmatpush1.bf16.msra.mxu0 0
    %259 = vmatprep.subr.bf16.mxu0 0
    %260 = vmatpush1.bf16.msra.mxu0 0
    %261 = vmatprep.subr.bf16.mxu0 0
    %262 = vmatpush1.bf16.msra.mxu0 %v88
    %263 = vmatprep.subr.bf16.mxu0 0
    %264 = vmatpush2.bf16.msra.mxu0 0
    %265 = vmatprep.subr.bf16.mxu0 0
    %266 = vmatpush2.bf16.msra.mxu0 0
    %267 = vmatprep.subr.bf16.mxu0 0
    %268 = vmatpush2.bf16.msra.mxu0 0
    %269 = vmatprep.subr.bf16.mxu0 0
    %270 = vmatpush2.bf16.msra.mxu0 0
    %271 = vmatprep.subr.bf16.mxu0 0
    %272 = vmatpush2.bf16.msra.mxu0 0
    %273 = vmatprep.subr.bf16.mxu0 0
    %274 = vmatpush2.bf16.msra.mxu0 0
    %275 = vmatprep.subr.bf16.mxu0 0
    %276 = vmatpush2.bf16.msra.mxu0 0
    %277 = vmatprep.subr.bf16.mxu0 0
    %278 = vmatpush2.bf16.msra.mxu0 0
    %279 = vmatprep.mubr.bf16.mxu0 0
    %280 = vmatmul.mubr.bf16.gmra.mxu0 %v245
    %v281 = vpop.f32.mrf.mxu0
    %v282 = vadd.f32 0.0, %v281
    %v283 = vpop.f32.mrf.mxu0
    %v284 = vpop.f32.mrf.mxu0
    %v285 = vpop.f32.mrf.mxu0
    %286 = vdwg.mxu0
    %287 = vmatprep.subr.bf16.mxu0 0
    %288 = vmatpush1.bf16.msra.mxu0 0
    %289 = vmatprep.subr.bf16.mxu0 0
    %290 = vmatpush1.bf16.msra.mxu0 0
    %291 = vmatprep.subr.bf16.mxu0 0
    %292 = vmatpush1.bf16.msra.mxu0 0
    %293 = vmatprep.subr.bf16.mxu0 0
    %294 = vmatpush1.bf16.msra.mxu0 0
    %295 = vmatprep.subr.bf16.mxu0 0
    %296 = vmatpush1.bf16.msra.mxu0 0
    %297 = vmatprep.subr.bf16.mxu0 0
    %298 = vmatpush1.bf16.msra.mxu0 0
    %299 = vmatprep.subr.bf16.mxu0 0
    %300 = vmatpush1.bf16.msra.mxu0 0
    %301 = vmatprep.subr.bf16.mxu0 0
    %302 = vmatpush1.bf16.msra.mxu0 %v138
    %303 = vmatprep.subr.bf16.mxu0 0
    %304 = vmatpush2.bf16.msra.mxu0 0
    %305 = vmatprep.subr.bf16.mxu0 0
    %306 = vmatpush2.bf16.msra.mxu0 0
    %307 = vmatprep.subr.bf16.mxu0 0
    %308 = vmatpush2.bf16.msra.mxu0 0
    %309 = vmatprep.subr.bf16.mxu0 0
    %310 = vmatpush2.bf16.msra.mxu0 0
    %311 = vmatprep.subr.bf16.mxu0 0
    %312 = vmatpush2.bf16.msra.mxu0 0
    %313 = vmatprep.subr.bf16.mxu0 0
    %314 = vmatpush2.bf16.msra.mxu0 0
    %315 = vmatprep.subr.bf16.mxu0 0
    %316 = vmatpush2.bf16.msra.mxu0 0
    %317 = vmatprep.subr.bf16.mxu0 0
    %318 = vmatpush2.bf16.msra.mxu0 0
    %319 = vmatprep.mubr.bf16.mxu0 0
    %320 = vmatmul.mubr.bf16.gmra.mxu0 %v193
    %v321 = vpop.f32.mrf.mxu0
    %v322 = vadd.f32 %v282, %v321
    %v323 = vpop.f32.mrf.mxu0
    %v324 = vpop.f32.mrf.mxu0
    %v325 = vpop.f32.mrf.mxu0
    %326 = vdwg.mxu0
    %v328 = vsel %vm90, %v71, 0
    %330 = vmatprep.subr.bf16.mxu0 0
    %331 = vmatpush1.bf16.msra.mxu0 0
    %332 = vmatprep.subr.bf16.mxu0 0
    %333 = vmatpush1.bf16.msra.mxu0 0
    %334 = vmatprep.subr.bf16.mxu0 0
    %335 = vmatpush1.bf16.msra.mxu0 0
    %336 = vmatprep.subr.bf16.mxu0 0
    %337 = vmatpush1.bf16.msra.mxu0 0
    %338 = vmatprep.subr.bf16.mxu0 0
    %339 = vmatpush1.bf16.msra.mxu0 0
    %340 = vmatprep.subr.bf16.mxu0 0
    %341 = vmatpush1.bf16.msra.mxu0 0
    %342 = vmatprep.subr.bf16.mxu0 0
    %343 = vmatpush1.bf16.msra.mxu0 0
    %344 = vmatprep.subr.bf16.mxu0 0
    %345 = vmatpush1.bf16.msra.mxu0 %v190
    %346 = vmatprep.subr.bf16.mxu0 0
    %347 = vmatpush2.bf16.msra.mxu0 0
    %348 = vmatprep.subr.bf16.mxu0 0
    %349 = vmatpush2.bf16.msra.mxu0 0
    %350 = vmatprep.subr.bf16.mxu0 0
    %351 = vmatpush2.bf16.msra.mxu0 0
    %352 = vmatprep.subr.bf16.mxu0 0
    %353 = vmatpush2.bf16.msra.mxu0 0
    %354 = vmatprep.subr.bf16.mxu0 0
    %355 = vmatpush2.bf16.msra.mxu0 0
    %356 = vmatprep.subr.bf16.mxu0 0
    %357 = vmatpush2.bf16.msra.mxu0 0
    %358 = vmatprep.subr.bf16.mxu0 0
    %359 = vmatpush2.bf16.msra.mxu0 0
    %360 = vmatprep.subr.bf16.mxu0 0
    %361 = vmatpush2.bf16.msra.mxu0 0
    %362 = vmatprep.mubr.bf16.mxu0 0
    %363 = vmatmul.mubr.bf16.gmra.mxu0 %v328
    %v364 = vpop.f32.mrf.mxu0
    %v365 = vadd.f32 0.0, %v364
    %v366 = vpop.f32.mrf.mxu0
    %v367 = vpop.f32.mrf.mxu0
    %v368 = vpop.f32.mrf.mxu0
    %369 = vdwg.mxu0
    %v370 = vadd.f32 %v322, %v365
    %v371 = vadd.f32 %v370, %v240
    %v372 = vmax.f32 %v371, 0.0
    %v373 = vrot.slane %v372, 7
    %v374 = vsel %vm76, 0.0, %v373
    %v375 = vpack.c.bf16 %v374, %v374
    %v376 = vld [vmem:[%s3] sm:$0xf]
    %v377 = vld [vmem:[%s3 + $0x4] sm:$0xf]
    %v378 = vld [vmem:[%s3 + $0x8] sm:$0xf]
    %v379 = vld [vmem:[%s3 + $0xc] sm:$0xf]
    %v380 = vld [vmem:[%s3 + $0x10] sm:$0xf]
    %v381 = vld [vmem:[%s3 + $0x14] sm:$0xf]
    %v382 = vld [vmem:[%s3 + $0x18] sm:$0xf]
    %v383 = vld [vmem:[%s3 + $0x1c] sm:$0xf]
    %v384 = vld [vmem:[%s3 + $0x20] sm:$0xf]
    %v385 = vld [vmem:[%s3 + $0x24] sm:$0xf]
    %v386 = vld [vmem:[%s3 + $0x28] sm:$0xf]
    %v387 = vld [vmem:[%s3 + $0x2c] sm:$0xf]
    %v388 = vld [vmem:[%s3 + $0x30] sm:$0xf]
    %v389 = vld [vmem:[%s3 + $0x34] sm:$0xf]
    %v390 = vld [vmem:[%s3 + $0x38] sm:$0xf]
    %v391 = vld [vmem:[%s3 + $0x3c] sm:$0xf]
    %v392 = vpack.c.bf16 %v243, %v243
    %s393 = scalar_lea.vmem %s3, 64
    %v394 = vld [vmem:[%s393] sm:$0xf]
    %v395 = vld [vmem:[%s393 + $0x4] sm:$0xf]
    %v396 = vld [vmem:[%s393 + $0x8] sm:$0xf]
    %v397 = vld [vmem:[%s393 + $0xc] sm:$0xf]
    %v398 = vld [vmem:[%s393 + $0x10] sm:$0xf]
    %v399 = vld [vmem:[%s393 + $0x14] sm:$0xf]
    %v400 = vld [vmem:[%s393 + $0x18] sm:$0xf]
    %v401 = vld [vmem:[%s393 + $0x1c] sm:$0xf]
    %v402 = vld [vmem:[%s393 + $0x20] sm:$0xf]
    %v403 = vld [vmem:[%s393 + $0x24] sm:$0xf]
    %v404 = vld [vmem:[%s393 + $0x28] sm:$0xf]
    %v405 = vld [vmem:[%s393 + $0x2c] sm:$0xf]
    %v406 = vld [vmem:[%s393 + $0x30] sm:$0xf]
    %v407 = vld [vmem:[%s393 + $0x34] sm:$0xf]
    %v408 = vld [vmem:[%s393 + $0x38] sm:$0xf]
    %v409 = vld [vmem:[%s393 + $0x3c] sm:$0xf]
    %v426 = vunpack.c.l.b16 %v394
    %v427 = vunpack.c.l.b16 %v395
    %v428 = vunpack.c.l.b16 %v396
    %v429 = vunpack.c.l.b16 %v397
    %v430 = vunpack.c.l.b16 %v398
    %v431 = vunpack.c.l.b16 %v399
    %v432 = vunpack.c.l.b16 %v400
    %v433 = vunpack.c.l.b16 %v401
    %v434 = vunpack.c.l.b16 %v402
    %v435 = vunpack.c.l.b16 %v403
    %v436 = vunpack.c.l.b16 %v404
    %v437 = vunpack.c.l.b16 %v405
    %v438 = vunpack.c.l.b16 %v406
    %v439 = vunpack.c.l.b16 %v407
    %v440 = vunpack.c.l.b16 %v408
    %v441 = vunpack.c.l.b16 %v409
    %v442 = vpack.c.b16 %v427, %v426
    %v443 = vpack.c.b16 %v429, %v428
    %v444 = vpack.c.b16 %v431, %v430
    %v445 = vpack.c.b16 %v433, %v432
    %v446 = vpack.c.b16 %v435, %v434
    %v447 = vpack.c.b16 %v437, %v436
    %v448 = vpack.c.b16 %v439, %v438
    %v449 = vpack.c.b16 %v441, %v440
    %458 = vmatprep.subr.bf16.mxu0 0
    %459 = vmatpush1.bf16.msra.mxu0 %v449
    %460 = vmatprep.subr.bf16.mxu0 0
    %461 = vmatpush1.bf16.msra.mxu0 %v448
    %462 = vmatprep.subr.bf16.mxu0 0
    %463 = vmatpush1.bf16.msra.mxu0 %v447
    %464 = vmatprep.subr.bf16.mxu0 0
    %465 = vmatpush1.bf16.msra.mxu0 %v446
    %466 = vmatprep.subr.bf16.mxu0 0
    %467 = vmatpush1.bf16.msra.mxu0 %v445
    %468 = vmatprep.subr.bf16.mxu0 0
    %469 = vmatpush1.bf16.msra.mxu0 %v444
    %470 = vmatprep.subr.bf16.mxu0 0
    %471 = vmatpush1.bf16.msra.mxu0 %v443
    %472 = vmatprep.subr.bf16.mxu0 0
    %473 = vmatpush1.bf16.msra.mxu0 %v442
    %474 = vmatprep.subr.bf16.mxu0 0
    %475 = vmatpush2.bf16.msra.mxu0 0
    %476 = vmatprep.subr.bf16.mxu0 0
    %477 = vmatpush2.bf16.msra.mxu0 0
    %478 = vmatprep.subr.bf16.mxu0 0
    %479 = vmatpush2.bf16.msra.mxu0 0
    %480 = vmatprep.subr.bf16.mxu0 0
    %481 = vmatpush2.bf16.msra.mxu0 0
    %482 = vmatprep.subr.bf16.mxu0 0
    %483 = vmatpush2.bf16.msra.mxu0 0
    %484 = vmatprep.subr.bf16.mxu0 0
    %485 = vmatpush2.bf16.msra.mxu0 0
    %486 = vmatprep.subr.bf16.mxu0 0
    %487 = vmatpush2.bf16.msra.mxu0 0
    %488 = vmatprep.subr.bf16.mxu0 0
    %489 = vmatpush2.bf16.msra.mxu0 0
    %490 = vmatprep.mubr.bf16.mxu0 0
    %491 = vmatmul.mubr.bf16.gmra.mxu0 %v392
    %v492 = vpop.f32.mrf.mxu0
    %v493 = vadd.f32 0.0, %v492
    %v494 = vpop.f32.mrf.mxu0
    %v495 = vpop.f32.mrf.mxu0
    %v496 = vpop.f32.mrf.mxu0
    %497 = vdwg.mxu0
    %v514 = vunpack.c.l.b16 %v376
    %v515 = vunpack.c.l.b16 %v377
    %v516 = vunpack.c.l.b16 %v378
    %v517 = vunpack.c.l.b16 %v379
    %v518 = vunpack.c.l.b16 %v380
    %v519 = vunpack.c.l.b16 %v381
    %v520 = vunpack.c.l.b16 %v382
    %v521 = vunpack.c.l.b16 %v383
    %v522 = vunpack.c.l.b16 %v384
    %v523 = vunpack.c.l.b16 %v385
    %v524 = vunpack.c.l.b16 %v386
    %v525 = vunpack.c.l.b16 %v387
    %v526 = vunpack.c.l.b16 %v388
    %v527 = vunpack.c.l.b16 %v389
    %v528 = vunpack.c.l.b16 %v390
    %v529 = vunpack.c.l.b16 %v391
    %v530 = vpack.c.b16 %v515, %v514
    %v531 = vpack.c.b16 %v517, %v516
    %v532 = vpack.c.b16 %v519, %v518
    %v533 = vpack.c.b16 %v521, %v520
    %v534 = vpack.c.b16 %v523, %v522
    %v535 = vpack.c.b16 %v525, %v524
    %v536 = vpack.c.b16 %v527, %v526
    %v537 = vpack.c.b16 %v529, %v528
    %546 = vmatprep.subr.bf16.mxu0 0
    %547 = vmatpush1.bf16.msra.mxu0 %v537
    %548 = vmatprep.subr.bf16.mxu0 0
    %549 = vmatpush1.bf16.msra.mxu0 %v536
    %550 = vmatprep.subr.bf16.mxu0 0
    %551 = vmatpush1.bf16.msra.mxu0 %v535
    %552 = vmatprep.subr.bf16.mxu0 0
    %553 = vmatpush1.bf16.msra.mxu0 %v534
    %554 = vmatprep.subr.bf16.mxu0 0
    %555 = vmatpush1.bf16.msra.mxu0 %v533
    %556 = vmatprep.subr.bf16.mxu0 0
    %557 = vmatpush1.bf16.msra.mxu0 %v532
    %558 = vmatprep.subr.bf16.mxu0 0
    %559 = vmatpush1.bf16.msra.mxu0 %v531
    %560 = vmatprep.subr.bf16.mxu0 0
    %561 = vmatpush1.bf16.msra.mxu0 %v530
    %562 = vmatprep.subr.bf16.mxu0 0
    %563 = vmatpush2.bf16.msra.mxu0 0
    %564 = vmatprep.subr.bf16.mxu0 0
    %565 = vmatpush2.bf16.msra.mxu0 0
    %566 = vmatprep.subr.bf16.mxu0 0
    %567 = vmatpush2.bf16.msra.mxu0 0
    %568 = vmatprep.subr.bf16.mxu0 0
    %569 = vmatpush2.bf16.msra.mxu0 0
    %570 = vmatprep.subr.bf16.mxu0 0
    %571 = vmatpush2.bf16.msra.mxu0 0
    %572 = vmatprep.subr.bf16.mxu0 0
    %573 = vmatpush2.bf16.msra.mxu0 0
    %574 = vmatprep.subr.bf16.mxu0 0
    %575 = vmatpush2.bf16.msra.mxu0 0
    %576 = vmatprep.subr.bf16.mxu0 0
    %577 = vmatpush2.bf16.msra.mxu0 0
    %578 = vmatprep.mubr.bf16.mxu0 0
    %579 = vmatmul.mubr.bf16.gmra.mxu0 %v375
    %v580 = vpop.f32.mrf.mxu0
    %v581 = vadd.f32 %v493, %v580
    %v582 = vpop.f32.mrf.mxu0
    %v583 = vpop.f32.mrf.mxu0
    %v584 = vpop.f32.mrf.mxu0
    %585 = vdwg.mxu0
    %v586 = vpack.c.bf16 %v372, %v372
    %s587 = scalar_lea.vmem %s3, 128
    %v588 = vld [vmem:[%s587] sm:$0xf]
    %v589 = vld [vmem:[%s587 + $0x4] sm:$0xf]
    %v590 = vld [vmem:[%s587 + $0x8] sm:$0xf]
    %v591 = vld [vmem:[%s587 + $0xc] sm:$0xf]
    %v592 = vld [vmem:[%s587 + $0x10] sm:$0xf]
    %v593 = vld [vmem:[%s587 + $0x14] sm:$0xf]
    %v594 = vld [vmem:[%s587 + $0x18] sm:$0xf]
    %v595 = vld [vmem:[%s587 + $0x1c] sm:$0xf]
    %v596 = vld [vmem:[%s587 + $0x20] sm:$0xf]
    %v597 = vld [vmem:[%s587 + $0x24] sm:$0xf]
    %v598 = vld [vmem:[%s587 + $0x28] sm:$0xf]
    %v599 = vld [vmem:[%s587 + $0x2c] sm:$0xf]
    %v600 = vld [vmem:[%s587 + $0x30] sm:$0xf]
    %v601 = vld [vmem:[%s587 + $0x34] sm:$0xf]
    %v602 = vld [vmem:[%s587 + $0x38] sm:$0xf]
    %v603 = vld [vmem:[%s587 + $0x3c] sm:$0xf]
    %v620 = vunpack.c.l.b16 %v588
    %v621 = vunpack.c.l.b16 %v589
    %v622 = vunpack.c.l.b16 %v590
    %v623 = vunpack.c.l.b16 %v591
    %v624 = vunpack.c.l.b16 %v592
    %v625 = vunpack.c.l.b16 %v593
    %v626 = vunpack.c.l.b16 %v594
    %v627 = vunpack.c.l.b16 %v595
    %v628 = vunpack.c.l.b16 %v596
    %v629 = vunpack.c.l.b16 %v597
    %v630 = vunpack.c.l.b16 %v598
    %v631 = vunpack.c.l.b16 %v599
    %v632 = vunpack.c.l.b16 %v600
    %v633 = vunpack.c.l.b16 %v601
    %v634 = vunpack.c.l.b16 %v602
    %v635 = vunpack.c.l.b16 %v603
    %v636 = vpack.c.b16 %v621, %v620
    %v637 = vpack.c.b16 %v623, %v622
    %v638 = vpack.c.b16 %v625, %v624
    %v639 = vpack.c.b16 %v627, %v626
    %v640 = vpack.c.b16 %v629, %v628
    %v641 = vpack.c.b16 %v631, %v630
    %v642 = vpack.c.b16 %v633, %v632
    %v643 = vpack.c.b16 %v635, %v634
    %652 = vmatprep.subr.bf16.mxu0 0
    %653 = vmatpush1.bf16.msra.mxu0 %v643
    %654 = vmatprep.subr.bf16.mxu0 0
    %655 = vmatpush1.bf16.msra.mxu0 %v642
    %656 = vmatprep.subr.bf16.mxu0 0
    %657 = vmatpush1.bf16.msra.mxu0 %v641
    %658 = vmatprep.subr.bf16.mxu0 0
    %659 = vmatpush1.bf16.msra.mxu0 %v640
    %660 = vmatprep.subr.bf16.mxu0 0
    %661 = vmatpush1.bf16.msra.mxu0 %v639
    %662 = vmatprep.subr.bf16.mxu0 0
    %663 = vmatpush1.bf16.msra.mxu0 %v638
    %664 = vmatprep.subr.bf16.mxu0 0
    %665 = vmatpush1.bf16.msra.mxu0 %v637
    %666 = vmatprep.subr.bf16.mxu0 0
    %667 = vmatpush1.bf16.msra.mxu0 %v636
    %668 = vmatprep.subr.bf16.mxu0 0
    %669 = vmatpush2.bf16.msra.mxu0 0
    %670 = vmatprep.subr.bf16.mxu0 0
    %671 = vmatpush2.bf16.msra.mxu0 0
    %672 = vmatprep.subr.bf16.mxu0 0
    %673 = vmatpush2.bf16.msra.mxu0 0
    %674 = vmatprep.subr.bf16.mxu0 0
    %675 = vmatpush2.bf16.msra.mxu0 0
    %676 = vmatprep.subr.bf16.mxu0 0
    %677 = vmatpush2.bf16.msra.mxu0 0
    %678 = vmatprep.subr.bf16.mxu0 0
    %679 = vmatpush2.bf16.msra.mxu0 0
    %680 = vmatprep.subr.bf16.mxu0 0
    %681 = vmatpush2.bf16.msra.mxu0 0
    %682 = vmatprep.subr.bf16.mxu0 0
    %683 = vmatpush2.bf16.msra.mxu0 0
    %684 = vmatprep.mubr.bf16.mxu0 0
    %685 = vmatmul.mubr.bf16.gmra.mxu0 %v586
    %v686 = vpop.f32.mrf.mxu0
    %v687 = vadd.f32 0.0, %v686
    %v688 = vpop.f32.mrf.mxu0
    %v689 = vpop.f32.mrf.mxu0
    %v690 = vpop.f32.mrf.mxu0
    %691 = vdwg.mxu0
    %v692 = vadd.f32 %v581, %v687
    %v693 = vld [vmem:[%s4] sm:$0x1]
    %v695 = vlaneseq
    %v696 = vshrl.u32 %v695, 7
    %v697 = vsub.s32 0, %v696
    %v698 = vrot.slane %v693, %v697
    %v700 = vadd.f32 %v692, %v698
    %v701 = vmax.f32 %v700, 0.0
    %702 = vst [vmem:[%s10] sm:$0xff] %v701
    %v703 = vld [vmem:[%s6] sm:$0x1]
    %v704 = vpack.c.bf16 %v701, %v701
    %s705 = scalar_lea.vmem [#allocation2], 64
    %v706 = vld [vmem:[%s705] sm:$0xf]
    %v707 = vld [vmem:[%s705 + $0x4] sm:$0xf]
    %v708 = vld [vmem:[%s705 + $0x8] sm:$0xf]
    %v709 = vld [vmem:[%s705 + $0xc] sm:$0xf]
    %v710 = vld [vmem:[%s705 + $0x10] sm:$0xf]
    %v711 = vld [vmem:[%s705 + $0x14] sm:$0xf]
    %v712 = vld [vmem:[%s705 + $0x18] sm:$0xf]
    %v713 = vld [vmem:[%s705 + $0x1c] sm:$0xf]
    %v714 = vld [vmem:[%s705 + $0x20] sm:$0xf]
    %v715 = vld [vmem:[%s705 + $0x24] sm:$0xf]
    %v716 = vld [vmem:[%s705 + $0x28] sm:$0xf]
    %v717 = vld [vmem:[%s705 + $0x2c] sm:$0xf]
    %v718 = vld [vmem:[%s705 + $0x30] sm:$0xf]
    %v719 = vld [vmem:[%s705 + $0x34] sm:$0xf]
    %v720 = vld [vmem:[%s705 + $0x38] sm:$0xf]
    %v721 = vld [vmem:[%s705 + $0x3c] sm:$0xf]
    %v723 = vlaneseq
    %v724 = vshrl.u32 %v723, 7
    %v725 = vsub.s32 0, %v724
    %v726 = vrot.slane %v703, %v725
    %v744 = vunpack.c.l.b16 %v706
    %v745 = vunpack.c.l.b16 %v707
    %v746 = vunpack.c.l.b16 %v708
    %v747 = vunpack.c.l.b16 %v709
    %v748 = vunpack.c.l.b16 %v710
    %v749 = vunpack.c.l.b16 %v711
    %v750 = vunpack.c.l.b16 %v712
    %v751 = vunpack.c.l.b16 %v713
    %v752 = vunpack.c.l.b16 %v714
    %v753 = vunpack.c.l.b16 %v715
    %v754 = vunpack.c.l.b16 %v716
    %v755 = vunpack.c.l.b16 %v717
    %v756 = vunpack.c.l.b16 %v718
    %v757 = vunpack.c.l.b16 %v719
    %v758 = vunpack.c.l.b16 %v720
    %v759 = vunpack.c.l.b16 %v721
    %v760 = vpack.c.b16 %v745, %v744
    %v761 = vpack.c.b16 %v747, %v746
    %v762 = vpack.c.b16 %v749, %v748
    %v763 = vpack.c.b16 %v751, %v750
    %v764 = vpack.c.b16 %v753, %v752
    %v765 = vpack.c.b16 %v755, %v754
    %v766 = vpack.c.b16 %v757, %v756
    %v767 = vpack.c.b16 %v759, %v758
    %776 = vmatprep.subr.bf16.mxu0 0
    %777 = vmatpush1.bf16.msra.mxu0 %v767
    %778 = vmatprep.subr.bf16.mxu0 0
    %779 = vmatpush1.bf16.msra.mxu0 %v766
    %780 = vmatprep.subr.bf16.mxu0 0
    %781 = vmatpush1.bf16.msra.mxu0 %v765
    %782 = vmatprep.subr.bf16.mxu0 0
    %783 = vmatpush1.bf16.msra.mxu0 %v764
    %784 = vmatprep.subr.bf16.mxu0 0
    %785 = vmatpush1.bf16.msra.mxu0 %v763
    %786 = vmatprep.subr.bf16.mxu0 0
    %787 = vmatpush1.bf16.msra.mxu0 %v762
    %788 = vmatprep.subr.bf16.mxu0 0
    %789 = vmatpush1.bf16.msra.mxu0 %v761
    %790 = vmatprep.subr.bf16.mxu0 0
    %791 = vmatpush1.bf16.msra.mxu0 %v760
    %792 = vmatprep.subr.bf16.mxu0 0
    %793 = vmatpush2.bf16.msra.mxu0 0
    %794 = vmatprep.subr.bf16.mxu0 0
    %795 = vmatpush2.bf16.msra.mxu0 0
    %796 = vmatprep.subr.bf16.mxu0 0
    %797 = vmatpush2.bf16.msra.mxu0 0
    %798 = vmatprep.subr.bf16.mxu0 0
    %799 = vmatpush2.bf16.msra.mxu0 0
    %800 = vmatprep.subr.bf16.mxu0 0
    %801 = vmatpush2.bf16.msra.mxu0 0
    %802 = vmatprep.subr.bf16.mxu0 0
    %803 = vmatpush2.bf16.msra.mxu0 0
    %804 = vmatprep.subr.bf16.mxu0 0
    %805 = vmatpush2.bf16.msra.mxu0 0
    %806 = vmatprep.subr.bf16.mxu0 0
    %807 = vmatpush2.bf16.msra.mxu0 0
    %808 = vmatprep.mubr.bf16.mxu0 0
    %809 = vmatmul.mubr.bf16.gmra.mxu0 %v704
    %v810 = vpop.f32.mrf.mxu0
    %v811 = vadd.f32 %v726, %v810
    %v812 = vpop.f32.mrf.mxu0
    %v813 = vpop.f32.mrf.mxu0
    %v814 = vpop.f32.mrf.mxu0
    %815 = vdwg.mxu0
    %v816 = vmax.f32 %v811, 0.0
    %s817 = scalar_lea.vmem [#allocation2], 128
    %v818 = vld [vmem:[%s817] sm:$0xf]
    %v819 = vld [vmem:[%s817 + $0x4] sm:$0xf]
    %v820 = vld [vmem:[%s817 + $0x8] sm:$0xf]
    %v821 = vld [vmem:[%s817 + $0xc] sm:$0xf]
    %v822 = vld [vmem:[%s817 + $0x10] sm:$0xf]
    %v823 = vld [vmem:[%s817 + $0x14] sm:$0xf]
    %v824 = vld [vmem:[%s817 + $0x18] sm:$0xf]
    %v825 = vld [vmem:[%s817 + $0x1c] sm:$0xf]
    %v826 = vld [vmem:[%s817 + $0x20] sm:$0xf]
    %v827 = vld [vmem:[%s817 + $0x24] sm:$0xf]
    %v828 = vld [vmem:[%s817 + $0x28] sm:$0xf]
    %v829 = vld [vmem:[%s817 + $0x2c] sm:$0xf]
    %v830 = vld [vmem:[%s817 + $0x30] sm:$0xf]
    %v831 = vld [vmem:[%s817 + $0x34] sm:$0xf]
    %v832 = vld [vmem:[%s817 + $0x38] sm:$0xf]
    %v833 = vld [vmem:[%s817 + $0x3c] sm:$0xf]
    %v834 = vrot.slane %v701, 1
    %v835 = vsel %vm64, 1, 0
    %vm836 = vcmp.eq.s32.totalorder %v835, 1
    %v837 = vsel %vm836, 0.0, %v834
    %v838 = vpack.c.bf16 %v837, %v837
    %v839 = vld [vmem:[#allocation2] sm:$0xf]
    %v840 = vld [vmem:[#allocation2 + $0x4] sm:$0xf]
    %v841 = vld [vmem:[#allocation2 + $0x8] sm:$0xf]
    %v842 = vld [vmem:[#allocation2 + $0xc] sm:$0xf]
    %v843 = vld [vmem:[#allocation2 + $0x10] sm:$0xf]
    %v844 = vld [vmem:[#allocation2 + $0x14] sm:$0xf]
    %v845 = vld [vmem:[#allocation2 + $0x18] sm:$0xf]
    %v846 = vld [vmem:[#allocation2 + $0x1c] sm:$0xf]
    %v847 = vld [vmem:[#allocation2 + $0x20] sm:$0xf]
    %v848 = vld [vmem:[#allocation2 + $0x24] sm:$0xf]
    %v849 = vld [vmem:[#allocation2 + $0x28] sm:$0xf]
    %v850 = vld [vmem:[#allocation2 + $0x2c] sm:$0xf]
    %v851 = vld [vmem:[#allocation2 + $0x30] sm:$0xf]
    %v852 = vld [vmem:[#allocation2 + $0x34] sm:$0xf]
    %v853 = vld [vmem:[#allocation2 + $0x38] sm:$0xf]
    %v854 = vld [vmem:[#allocation2 + $0x3c] sm:$0xf]
    %v871 = vunpack.c.l.b16 %v839
    %v872 = vunpack.c.l.b16 %v840
    %v873 = vunpack.c.l.b16 %v841
    %v874 = vunpack.c.l.b16 %v842
    %v875 = vunpack.c.l.b16 %v843
    %v876 = vunpack.c.l.b16 %v844
    %v877 = vunpack.c.l.b16 %v845
    %v878 = vunpack.c.l.b16 %v846
    %v879 = vunpack.c.l.b16 %v847
    %v880 = vunpack.c.l.b16 %v848
    %v881 = vunpack.c.l.b16 %v849
    %v882 = vunpack.c.l.b16 %v850
    %v883 = vunpack.c.l.b16 %v851
    %v884 = vunpack.c.l.b16 %v852
    %v885 = vunpack.c.l.b16 %v853
    %v886 = vunpack.c.l.b16 %v854
    %v887 = vpack.c.b16 %v872, %v871
    %v888 = vpack.c.b16 %v874, %v873
    %v889 = vpack.c.b16 %v876, %v875
    %v890 = vpack.c.b16 %v878, %v877
    %v891 = vpack.c.b16 %v880, %v879
    %v892 = vpack.c.b16 %v882, %v881
    %v893 = vpack.c.b16 %v884, %v883
    %v894 = vpack.c.b16 %v886, %v885
    %903 = vmatprep.subr.bf16.mxu0 0
    %904 = vmatpush1.bf16.msra.mxu0 %v894
    %905 = vmatprep.subr.bf16.mxu0 0
    %906 = vmatpush1.bf16.msra.mxu0 %v893
    %907 = vmatprep.subr.bf16.mxu0 0
    %908 = vmatpush1.bf16.msra.mxu0 %v892
    %909 = vmatprep.subr.bf16.mxu0 0
    %910 = vmatpush1.bf16.msra.mxu0 %v891
    %911 = vmatprep.subr.bf16.mxu0 0
    %912 = vmatpush1.bf16.msra.mxu0 %v890
    %913 = vmatprep.subr.bf16.mxu0 0
    %914 = vmatpush1.bf16.msra.mxu0 %v889
    %915 = vmatprep.subr.bf16.mxu0 0
    %916 = vmatpush1.bf16.msra.mxu0 %v888
    %917 = vmatprep.subr.bf16.mxu0 0
    %918 = vmatpush1.bf16.msra.mxu0 %v887
    %919 = vmatprep.subr.bf16.mxu0 0
    %920 = vmatpush2.bf16.msra.mxu0 0
    %921 = vmatprep.subr.bf16.mxu0 0
    %922 = vmatpush2.bf16.msra.mxu0 0
    %923 = vmatprep.subr.bf16.mxu0 0
    %924 = vmatpush2.bf16.msra.mxu0 0
    %925 = vmatprep.subr.bf16.mxu0 0
    %926 = vmatpush2.bf16.msra.mxu0 0
    %927 = vmatprep.subr.bf16.mxu0 0
    %928 = vmatpush2.bf16.msra.mxu0 0
    %929 = vmatprep.subr.bf16.mxu0 0
    %930 = vmatpush2.bf16.msra.mxu0 0
    %931 = vmatprep.subr.bf16.mxu0 0
    %932 = vmatpush2.bf16.msra.mxu0 0
    %933 = vmatprep.subr.bf16.mxu0 0
    %934 = vmatpush2.bf16.msra.mxu0 0
    %935 = vmatprep.mubr.bf16.mxu0 0
    %936 = vmatmul.mubr.bf16.gmra.mxu0 %v838
    %v937 = vpop.f32.mrf.mxu0
    %v938 = vadd.f32 0.0, %v937
    %v939 = vpop.f32.mrf.mxu0
    %v940 = vpop.f32.mrf.mxu0
    %v941 = vpop.f32.mrf.mxu0
    %942 = vdwg.mxu0
    %v959 = vunpack.c.l.b16 %v818
    %v960 = vunpack.c.l.b16 %v819
    %v961 = vunpack.c.l.b16 %v820
    %v962 = vunpack.c.l.b16 %v821
    %v963 = vunpack.c.l.b16 %v822
    %v964 = vunpack.c.l.b16 %v823
    %v965 = vunpack.c.l.b16 %v824
    %v966 = vunpack.c.l.b16 %v825
    %v967 = vunpack.c.l.b16 %v826
    %v968 = vunpack.c.l.b16 %v827
    %v969 = vunpack.c.l.b16 %v828
    %v970 = vunpack.c.l.b16 %v829
    %v971 = vunpack.c.l.b16 %v830
    %v972 = vunpack.c.l.b16 %v831
    %v973 = vunpack.c.l.b16 %v832
    %v974 = vunpack.c.l.b16 %v833
    %v975 = vpack.c.b16 %v960, %v959
    %v976 = vpack.c.b16 %v962, %v961
    %v977 = vpack.c.b16 %v964, %v963
    %v978 = vpack.c.b16 %v966, %v965
    %v979 = vpack.c.b16 %v968, %v967
    %v980 = vpack.c.b16 %v970, %v969
    %v981 = vpack.c.b16 %v972, %v971
    %v982 = vpack.c.b16 %v974, %v973
    %991 = vmatprep.subr.bf16.mxu0 0
    %992 = vmatpush1.bf16.msra.mxu0 %v982
    %993 = vmatprep.subr.bf16.mxu0 0
    %994 = vmatpush1.bf16.msra.mxu0 %v981
    %995 = vmatprep.subr.bf16.mxu0 0
    %996 = vmatpush1.bf16.msra.mxu0 %v980
    %997 = vmatprep.subr.bf16.mxu0 0
    %998 = vmatpush1.bf16.msra.mxu0 %v979
    %999 = vmatprep.subr.bf16.mxu0 0
    %1000 = vmatpush1.bf16.msra.mxu0 %v978
    %1001 = vmatprep.subr.bf16.mxu0 0
    %1002 = vmatpush1.bf16.msra.mxu0 %v977
    %1003 = vmatprep.subr.bf16.mxu0 0
    %1004 = vmatpush1.bf16.msra.mxu0 %v976
    %1005 = vmatprep.subr.bf16.mxu0 0
    %1006 = vmatpush1.bf16.msra.mxu0 %v975
    %1007 = vmatprep.subr.bf16.mxu0 0
    %1008 = vmatpush2.bf16.msra.mxu0 0
    %1009 = vmatprep.subr.bf16.mxu0 0
    %1010 = vmatpush2.bf16.msra.mxu0 0
    %1011 = vmatprep.subr.bf16.mxu0 0
    %1012 = vmatpush2.bf16.msra.mxu0 0
    %1013 = vmatprep.subr.bf16.mxu0 0
    %1014 = vmatpush2.bf16.msra.mxu0 0
    %1015 = vmatprep.subr.bf16.mxu0 0
    %1016 = vmatpush2.bf16.msra.mxu0 0
    %1017 = vmatprep.subr.bf16.mxu0 0
    %1018 = vmatpush2.bf16.msra.mxu0 0
    %1019 = vmatprep.subr.bf16.mxu0 0
    %1020 = vmatpush2.bf16.msra.mxu0 0
    %1021 = vmatprep.subr.bf16.mxu0 0
    %1022 = vmatpush2.bf16.msra.mxu0 0
    %1023 = vmatprep.mubr.bf16.mxu0 0
    %1024 = vmatmul.mubr.bf16.gmra.mxu0 %v704
    %v1025 = vpop.f32.mrf.mxu0
    %v1026 = vadd.f32 %v938, %v1025
    %v1027 = vpop.f32.mrf.mxu0
    %v1028 = vpop.f32.mrf.mxu0
    %v1029 = vpop.f32.mrf.mxu0
    %1030 = vdwg.mxu0
    %v1031 = vadd.f32 %v1026, %v726
    %v1032 = vmax.f32 %v1031, 0.0
    %v1033 = vld [vmem:[%s8] sm:$0x1]
    %v1034 = vpack.c.bf16 %v816, %v816
    %s1035 = scalar_lea.vmem %s7, 64
    %v1036 = vld [vmem:[%s1035] sm:$0xf]
    %v1037 = vld [vmem:[%s1035 + $0x4] sm:$0xf]
    %v1038 = vld [vmem:[%s1035 + $0x8] sm:$0xf]
    %v1039 = vld [vmem:[%s1035 + $0xc] sm:$0xf]
    %v1040 = vld [vmem:[%s1035 + $0x10] sm:$0xf]
    %v1041 = vld [vmem:[%s1035 + $0x14] sm:$0xf]
    %v1042 = vld [vmem:[%s1035 + $0x18] sm:$0xf]
    %v1043 = vld [vmem:[%s1035 + $0x1c] sm:$0xf]
    %v1044 = vld [vmem:[%s1035 + $0x20] sm:$0xf]
    %v1045 = vld [vmem:[%s1035 + $0x24] sm:$0xf]
    %v1046 = vld [vmem:[%s1035 + $0x28] sm:$0xf]
    %v1047 = vld [vmem:[%s1035 + $0x2c] sm:$0xf]
    %v1048 = vld [vmem:[%s1035 + $0x30] sm:$0xf]
    %v1049 = vld [vmem:[%s1035 + $0x34] sm:$0xf]
    %v1050 = vld [vmem:[%s1035 + $0x38] sm:$0xf]
    %v1051 = vld [vmem:[%s1035 + $0x3c] sm:$0xf]
    %v1053 = vlaneseq
    %v1054 = vshrl.u32 %v1053, 7
    %v1055 = vsub.s32 0, %v1054
    %v1056 = vrot.slane %v1033, %v1055
    %v1074 = vunpack.c.l.b16 %v1036
    %v1075 = vunpack.c.l.b16 %v1037
    %v1076 = vunpack.c.l.b16 %v1038
    %v1077 = vunpack.c.l.b16 %v1039
    %v1078 = vunpack.c.l.b16 %v1040
    %v1079 = vunpack.c.l.b16 %v1041
    %v1080 = vunpack.c.l.b16 %v1042
    %v1081 = vunpack.c.l.b16 %v1043
    %v1082 = vunpack.c.l.b16 %v1044
    %v1083 = vunpack.c.l.b16 %v1045
    %v1084 = vunpack.c.l.b16 %v1046
    %v1085 = vunpack.c.l.b16 %v1047
    %v1086 = vunpack.c.l.b16 %v1048
    %v1087 = vunpack.c.l.b16 %v1049
    %v1088 = vunpack.c.l.b16 %v1050
    %v1089 = vunpack.c.l.b16 %v1051
    %v1090 = vpack.c.b16 %v1075, %v1074
    %v1091 = vpack.c.b16 %v1077, %v1076
    %v1092 = vpack.c.b16 %v1079, %v1078
    %v1093 = vpack.c.b16 %v1081, %v1080
    %v1094 = vpack.c.b16 %v1083, %v1082
    %v1095 = vpack.c.b16 %v1085, %v1084
    %v1096 = vpack.c.b16 %v1087, %v1086
    %v1097 = vpack.c.b16 %v1089, %v1088
    %1106 = vmatprep.subr.bf16.mxu0 0
    %1107 = vmatpush1.bf16.msra.mxu0 %v1097
    %1108 = vmatprep.subr.bf16.mxu0 0
    %1109 = vmatpush1.bf16.msra.mxu0 %v1096
    %1110 = vmatprep.subr.bf16.mxu0 0
    %1111 = vmatpush1.bf16.msra.mxu0 %v1095
    %1112 = vmatprep.subr.bf16.mxu0 0
    %1113 = vmatpush1.bf16.msra.mxu0 %v1094
    %1114 = vmatprep.subr.bf16.mxu0 0
    %1115 = vmatpush1.bf16.msra.mxu0 %v1093
    %1116 = vmatprep.subr.bf16.mxu0 0
    %1117 = vmatpush1.bf16.msra.mxu0 %v1092
    %1118 = vmatprep.subr.bf16.mxu0 0
    %1119 = vmatpush1.bf16.msra.mxu0 %v1091
    %1120 = vmatprep.subr.bf16.mxu0 0
    %1121 = vmatpush1.bf16.msra.mxu0 %v1090
    %1122 = vmatprep.subr.bf16.mxu0 0
    %1123 = vmatpush2.bf16.msra.mxu0 0
    %1124 = vmatprep.subr.bf16.mxu0 0
    %1125 = vmatpush2.bf16.msra.mxu0 0
    %1126 = vmatprep.subr.bf16.mxu0 0
    %1127 = vmatpush2.bf16.msra.mxu0 0
    %1128 = vmatprep.subr.bf16.mxu0 0
    %1129 = vmatpush2.bf16.msra.mxu0 0
    %1130 = vmatprep.subr.bf16.mxu0 0
    %1131 = vmatpush2.bf16.msra.mxu0 0
    %1132 = vmatprep.subr.bf16.mxu0 0
    %1133 = vmatpush2.bf16.msra.mxu0 0
    %1134 = vmatprep.subr.bf16.mxu0 0
    %1135 = vmatpush2.bf16.msra.mxu0 0
    %1136 = vmatprep.subr.bf16.mxu0 0
    %1137 = vmatpush2.bf16.msra.mxu0 0
    %1138 = vmatprep.mubr.bf16.mxu0 0
    %1139 = vmatmul.mubr.bf16.gmra.mxu0 %v1034
    %v1140 = vpop.f32.mrf.mxu0
    %v1141 = vadd.f32 %v1056, %v1140
    %v1142 = vpop.f32.mrf.mxu0
    %v1143 = vpop.f32.mrf.mxu0
    %v1144 = vpop.f32.mrf.mxu0
    %1145 = vdwg.mxu0
    %s1146 = scalar_lea.vmem %s7, 128
    %v1147 = vld [vmem:[%s1146] sm:$0xf]
    %v1148 = vld [vmem:[%s1146 + $0x4] sm:$0xf]
    %v1149 = vld [vmem:[%s1146 + $0x8] sm:$0xf]
    %v1150 = vld [vmem:[%s1146 + $0xc] sm:$0xf]
    %v1151 = vld [vmem:[%s1146 + $0x10] sm:$0xf]
    %v1152 = vld [vmem:[%s1146 + $0x14] sm:$0xf]
    %v1153 = vld [vmem:[%s1146 + $0x18] sm:$0xf]
    %v1154 = vld [vmem:[%s1146 + $0x1c] sm:$0xf]
    %v1155 = vld [vmem:[%s1146 + $0x20] sm:$0xf]
    %v1156 = vld [vmem:[%s1146 + $0x24] sm:$0xf]
    %v1157 = vld [vmem:[%s1146 + $0x28] sm:$0xf]
    %v1158 = vld [vmem:[%s1146 + $0x2c] sm:$0xf]
    %v1159 = vld [vmem:[%s1146 + $0x30] sm:$0xf]
    %v1160 = vld [vmem:[%s1146 + $0x34] sm:$0xf]
    %v1161 = vld [vmem:[%s1146 + $0x38] sm:$0xf]
    %v1162 = vld [vmem:[%s1146 + $0x3c] sm:$0xf]
    %v1163 = vpack.c.bf16 %v1032, %v1032
    %v1164 = vld [vmem:[%s7] sm:$0xf]
    %v1165 = vld [vmem:[%s7 + $0x4] sm:$0xf]
    %v1166 = vld [vmem:[%s7 + $0x8] sm:$0xf]
    %v1167 = vld [vmem:[%s7 + $0xc] sm:$0xf]
    %v1168 = vld [vmem:[%s7 + $0x10] sm:$0xf]
    %v1169 = vld [vmem:[%s7 + $0x14] sm:$0xf]
    %v1170 = vld [vmem:[%s7 + $0x18] sm:$0xf]
    %v1171 = vld [vmem:[%s7 + $0x1c] sm:$0xf]
    %v1172 = vld [vmem:[%s7 + $0x20] sm:$0xf]
    %v1173 = vld [vmem:[%s7 + $0x24] sm:$0xf]
    %v1174 = vld [vmem:[%s7 + $0x28] sm:$0xf]
    %v1175 = vld [vmem:[%s7 + $0x2c] sm:$0xf]
    %v1176 = vld [vmem:[%s7 + $0x30] sm:$0xf]
    %v1177 = vld [vmem:[%s7 + $0x34] sm:$0xf]
    %v1178 = vld [vmem:[%s7 + $0x38] sm:$0xf]
    %v1179 = vld [vmem:[%s7 + $0x3c] sm:$0xf]
    %v1196 = vunpack.c.l.b16 %v1164
    %v1197 = vunpack.c.l.b16 %v1165
    %v1198 = vunpack.c.l.b16 %v1166
    %v1199 = vunpack.c.l.b16 %v1167
    %v1200 = vunpack.c.l.b16 %v1168
    %v1201 = vunpack.c.l.b16 %v1169
    %v1202 = vunpack.c.l.b16 %v1170
    %v1203 = vunpack.c.l.b16 %v1171
    %v1204 = vunpack.c.l.b16 %v1172
    %v1205 = vunpack.c.l.b16 %v1173
    %v1206 = vunpack.c.l.b16 %v1174
    %v1207 = vunpack.c.l.b16 %v1175
    %v1208 = vunpack.c.l.b16 %v1176
    %v1209 = vunpack.c.l.b16 %v1177
    %v1210 = vunpack.c.l.b16 %v1178
    %v1211 = vunpack.c.l.b16 %v1179
    %v1212 = vpack.c.b16 %v1197, %v1196
    %v1213 = vpack.c.b16 %v1199, %v1198
    %v1214 = vpack.c.b16 %v1201, %v1200
    %v1215 = vpack.c.b16 %v1203, %v1202
    %v1216 = vpack.c.b16 %v1205, %v1204
    %v1217 = vpack.c.b16 %v1207, %v1206
    %v1218 = vpack.c.b16 %v1209, %v1208
    %v1219 = vpack.c.b16 %v1211, %v1210
    %1228 = vmatprep.subr.bf16.mxu0 0
    %1229 = vmatpush1.bf16.msra.mxu0 %v1219
    %1230 = vmatprep.subr.bf16.mxu0 0
    %1231 = vmatpush1.bf16.msra.mxu0 %v1218
    %1232 = vmatprep.subr.bf16.mxu0 0
    %1233 = vmatpush1.bf16.msra.mxu0 %v1217
    %1234 = vmatprep.subr.bf16.mxu0 0
    %1235 = vmatpush1.bf16.msra.mxu0 %v1216
    %1236 = vmatprep.subr.bf16.mxu0 0
    %1237 = vmatpush1.bf16.msra.mxu0 %v1215
    %1238 = vmatprep.subr.bf16.mxu0 0
    %1239 = vmatpush1.bf16.msra.mxu0 %v1214
    %1240 = vmatprep.subr.bf16.mxu0 0
    %1241 = vmatpush1.bf16.msra.mxu0 %v1213
    %1242 = vmatprep.subr.bf16.mxu0 0
    %1243 = vmatpush1.bf16.msra.mxu0 %v1212
    %1244 = vmatprep.subr.bf16.mxu0 0
    %1245 = vmatpush2.bf16.msra.mxu0 0
    %1246 = vmatprep.subr.bf16.mxu0 0
    %1247 = vmatpush2.bf16.msra.mxu0 0
    %1248 = vmatprep.subr.bf16.mxu0 0
    %1249 = vmatpush2.bf16.msra.mxu0 0
    %1250 = vmatprep.subr.bf16.mxu0 0
    %1251 = vmatpush2.bf16.msra.mxu0 0
    %1252 = vmatprep.subr.bf16.mxu0 0
    %1253 = vmatpush2.bf16.msra.mxu0 0
    %1254 = vmatprep.subr.bf16.mxu0 0
    %1255 = vmatpush2.bf16.msra.mxu0 0
    %1256 = vmatprep.subr.bf16.mxu0 0
    %1257 = vmatpush2.bf16.msra.mxu0 0
    %1258 = vmatprep.subr.bf16.mxu0 0
    %1259 = vmatpush2.bf16.msra.mxu0 0
    %1260 = vmatprep.mubr.bf16.mxu0 0
    %1261 = vmatmul.mubr.bf16.gmra.mxu0 %v1163
    %v1262 = vpop.f32.mrf.mxu0
    %v1263 = vadd.f32 0.0, %v1262
    %v1264 = vpop.f32.mrf.mxu0
    %v1265 = vpop.f32.mrf.mxu0
    %v1266 = vpop.f32.mrf.mxu0
    %1267 = vdwg.mxu0
    %v1284 = vunpack.c.l.b16 %v1147
    %v1285 = vunpack.c.l.b16 %v1148
    %v1286 = vunpack.c.l.b16 %v1149
    %v1287 = vunpack.c.l.b16 %v1150
    %v1288 = vunpack.c.l.b16 %v1151
    %v1289 = vunpack.c.l.b16 %v1152
    %v1290 = vunpack.c.l.b16 %v1153
    %v1291 = vunpack.c.l.b16 %v1154
    %v1292 = vunpack.c.l.b16 %v1155
    %v1293 = vunpack.c.l.b16 %v1156
    %v1294 = vunpack.c.l.b16 %v1157
    %v1295 = vunpack.c.l.b16 %v1158
    %v1296 = vunpack.c.l.b16 %v1159
    %v1297 = vunpack.c.l.b16 %v1160
    %v1298 = vunpack.c.l.b16 %v1161
    %v1299 = vunpack.c.l.b16 %v1162
    %v1300 = vpack.c.b16 %v1285, %v1284
    %v1301 = vpack.c.b16 %v1287, %v1286
    %v1302 = vpack.c.b16 %v1289, %v1288
    %v1303 = vpack.c.b16 %v1291, %v1290
    %v1304 = vpack.c.b16 %v1293, %v1292
    %v1305 = vpack.c.b16 %v1295, %v1294
    %v1306 = vpack.c.b16 %v1297, %v1296
    %v1307 = vpack.c.b16 %v1299, %v1298
    %1316 = vmatprep.subr.bf16.mxu0 0
    %1317 = vmatpush1.bf16.msra.mxu0 %v1307
    %1318 = vmatprep.subr.bf16.mxu0 0
    %1319 = vmatpush1.bf16.msra.mxu0 %v1306
    %1320 = vmatprep.subr.bf16.mxu0 0
    %1321 = vmatpush1.bf16.msra.mxu0 %v1305
    %1322 = vmatprep.subr.bf16.mxu0 0
    %1323 = vmatpush1.bf16.msra.mxu0 %v1304
    %1324 = vmatprep.subr.bf16.mxu0 0
    %1325 = vmatpush1.bf16.msra.mxu0 %v1303
    %1326 = vmatprep.subr.bf16.mxu0 0
    %1327 = vmatpush1.bf16.msra.mxu0 %v1302
    %1328 = vmatprep.subr.bf16.mxu0 0
    %1329 = vmatpush1.bf16.msra.mxu0 %v1301
    %1330 = vmatprep.subr.bf16.mxu0 0
    %1331 = vmatpush1.bf16.msra.mxu0 %v1300
    %1332 = vmatprep.subr.bf16.mxu0 0
    %1333 = vmatpush2.bf16.msra.mxu0 0
    %1334 = vmatprep.subr.bf16.mxu0 0
    %1335 = vmatpush2.bf16.msra.mxu0 0
    %1336 = vmatprep.subr.bf16.mxu0 0
    %1337 = vmatpush2.bf16.msra.mxu0 0
    %1338 = vmatprep.subr.bf16.mxu0 0
    %1339 = vmatpush2.bf16.msra.mxu0 0
    %1340 = vmatprep.subr.bf16.mxu0 0
    %1341 = vmatpush2.bf16.msra.mxu0 0
    %1342 = vmatprep.subr.bf16.mxu0 0
    %1343 = vmatpush2.bf16.msra.mxu0 0
    %1344 = vmatprep.subr.bf16.mxu0 0
    %1345 = vmatpush2.bf16.msra.mxu0 0
    %1346 = vmatprep.subr.bf16.mxu0 0
    %1347 = vmatpush2.bf16.msra.mxu0 0
    %1348 = vmatprep.mubr.bf16.mxu0 0
    %1349 = vmatmul.mubr.bf16.gmra.mxu0 %v1034
    %v1350 = vpop.f32.mrf.mxu0
    %v1351 = vadd.f32 %v1263, %v1350
    %v1352 = vpop.f32.mrf.mxu0
    %v1353 = vpop.f32.mrf.mxu0
    %v1354 = vpop.f32.mrf.mxu0
    %1355 = vdwg.mxu0
    %v1356 = vadd.f32 %v1351, %v1056
    %1357 = vmatprep.subr.bf16.mxu0 0
    %1358 = vmatpush1.bf16.msra.mxu0 %v1097
    %1359 = vmatprep.subr.bf16.mxu0 0
    %1360 = vmatpush1.bf16.msra.mxu0 %v1096
    %1361 = vmatprep.subr.bf16.mxu0 0
    %1362 = vmatpush1.bf16.msra.mxu0 %v1095
    %1363 = vmatprep.subr.bf16.mxu0 0
    %1364 = vmatpush1.bf16.msra.mxu0 %v1094
    %1365 = vmatprep.subr.bf16.mxu0 0
    %1366 = vmatpush1.bf16.msra.mxu0 %v1093
    %1367 = vmatprep.subr.bf16.mxu0 0
    %1368 = vmatpush1.bf16.msra.mxu0 %v1092
    %1369 = vmatprep.subr.bf16.mxu0 0
    %1370 = vmatpush1.bf16.msra.mxu0 %v1091
    %1371 = vmatprep.subr.bf16.mxu0 0
    %1372 = vmatpush1.bf16.msra.mxu0 %v1090
    %1373 = vmatprep.subr.bf16.mxu0 0
    %1374 = vmatpush2.bf16.msra.mxu0 0
    %1375 = vmatprep.subr.bf16.mxu0 0
    %1376 = vmatpush2.bf16.msra.mxu0 0
    %1377 = vmatprep.subr.bf16.mxu0 0
    %1378 = vmatpush2.bf16.msra.mxu0 0
    %1379 = vmatprep.subr.bf16.mxu0 0
    %1380 = vmatpush2.bf16.msra.mxu0 0
    %1381 = vmatprep.subr.bf16.mxu0 0
    %1382 = vmatpush2.bf16.msra.mxu0 0
    %1383 = vmatprep.subr.bf16.mxu0 0
    %1384 = vmatpush2.bf16.msra.mxu0 0
    %1385 = vmatprep.subr.bf16.mxu0 0
    %1386 = vmatpush2.bf16.msra.mxu0 0
    %1387 = vmatprep.subr.bf16.mxu0 0
    %1388 = vmatpush2.bf16.msra.mxu0 0
    %1389 = vmatprep.mubr.bf16.mxu0 0
    %1390 = vmatmul.mubr.bf16.gmra.mxu0 %v1163
    %v1391 = vpop.f32.mrf.mxu0
    %v1392 = vadd.f32 %v1056, %v1391
    %v1393 = vpop.f32.mrf.mxu0
    %v1394 = vpop.f32.mrf.mxu0
    %v1395 = vpop.f32.mrf.mxu0
    %1396 = vdwg.mxu0
    %v1397 = vrot.slane %v816, 1
    %v1398 = vsel %vm836, 0.0, %v1397
    %v1399 = vpack.c.bf16 %v1398, %v1398
    %1400 = vmatprep.subr.bf16.mxu0 0
    %1401 = vmatpush1.bf16.msra.mxu0 %v1219
    %1402 = vmatprep.subr.bf16.mxu0 0
    %1403 = vmatpush1.bf16.msra.mxu0 %v1218
    %1404 = vmatprep.subr.bf16.mxu0 0
    %1405 = vmatpush1.bf16.msra.mxu0 %v1217
    %1406 = vmatprep.subr.bf16.mxu0 0
    %1407 = vmatpush1.bf16.msra.mxu0 %v1216
    %1408 = vmatprep.subr.bf16.mxu0 0
    %1409 = vmatpush1.bf16.msra.mxu0 %v1215
    %1410 = vmatprep.subr.bf16.mxu0 0
    %1411 = vmatpush1.bf16.msra.mxu0 %v1214
    %1412 = vmatprep.subr.bf16.mxu0 0
    %1413 = vmatpush1.bf16.msra.mxu0 %v1213
    %1414 = vmatprep.subr.bf16.mxu0 0
    %1415 = vmatpush1.bf16.msra.mxu0 %v1212
    %1416 = vmatprep.subr.bf16.mxu0 0
    %1417 = vmatpush2.bf16.msra.mxu0 0
    %1418 = vmatprep.subr.bf16.mxu0 0
    %1419 = vmatpush2.bf16.msra.mxu0 0
    %1420 = vmatprep.subr.bf16.mxu0 0
    %1421 = vmatpush2.bf16.msra.mxu0 0
    %1422 = vmatprep.subr.bf16.mxu0 0
    %1423 = vmatpush2.bf16.msra.mxu0 0
    %1424 = vmatprep.subr.bf16.mxu0 0
    %1425 = vmatpush2.bf16.msra.mxu0 0
    %1426 = vmatprep.subr.bf16.mxu0 0
    %1427 = vmatpush2.bf16.msra.mxu0 0
    %1428 = vmatprep.subr.bf16.mxu0 0
    %1429 = vmatpush2.bf16.msra.mxu0 0
    %1430 = vmatprep.subr.bf16.mxu0 0
    %1431 = vmatpush2.bf16.msra.mxu0 0
    %1432 = vmatprep.mubr.bf16.mxu0 0
    %1433 = vmatmul.mubr.bf16.gmra.mxu0 %v1399
    %v1434 = vpop.f32.mrf.mxu0
    %v1435 = vadd.f32 0.0, %v1434
    %v1436 = vpop.f32.mrf.mxu0
    %v1437 = vpop.f32.mrf.mxu0
    %v1438 = vpop.f32.mrf.mxu0
    %1439 = vdwg.mxu0
    %1440 = vmatprep.subr.bf16.mxu0 0
    %1441 = vmatpush1.bf16.msra.mxu0 %v1307
    %1442 = vmatprep.subr.bf16.mxu0 0
    %1443 = vmatpush1.bf16.msra.mxu0 %v1306
    %1444 = vmatprep.subr.bf16.mxu0 0
    %1445 = vmatpush1.bf16.msra.mxu0 %v1305
    %1446 = vmatprep.subr.bf16.mxu0 0
    %1447 = vmatpush1.bf16.msra.mxu0 %v1304
    %1448 = vmatprep.subr.bf16.mxu0 0
    %1449 = vmatpush1.bf16.msra.mxu0 %v1303
    %1450 = vmatprep.subr.bf16.mxu0 0
    %1451 = vmatpush1.bf16.msra.mxu0 %v1302
    %1452 = vmatprep.subr.bf16.mxu0 0
    %1453 = vmatpush1.bf16.msra.mxu0 %v1301
    %1454 = vmatprep.subr.bf16.mxu0 0
    %1455 = vmatpush1.bf16.msra.mxu0 %v1300
    %1456 = vmatprep.subr.bf16.mxu0 0
    %1457 = vmatpush2.bf16.msra.mxu0 0
    %1458 = vmatprep.subr.bf16.mxu0 0
    %1459 = vmatpush2.bf16.msra.mxu0 0
    %1460 = vmatprep.subr.bf16.mxu0 0
    %1461 = vmatpush2.bf16.msra.mxu0 0
    %1462 = vmatprep.subr.bf16.mxu0 0
    %1463 = vmatpush2.bf16.msra.mxu0 0
    %1464 = vmatprep.subr.bf16.mxu0 0
    %1465 = vmatpush2.bf16.msra.mxu0 0
    %1466 = vmatprep.subr.bf16.mxu0 0
    %1467 = vmatpush2.bf16.msra.mxu0 0
    %1468 = vmatprep.subr.bf16.mxu0 0
    %1469 = vmatpush2.bf16.msra.mxu0 0
    %1470 = vmatprep.subr.bf16.mxu0 0
    %1471 = vmatpush2.bf16.msra.mxu0 0
    %1472 = vmatprep.mubr.bf16.mxu0 0
    %1473 = vmatmul.mubr.bf16.gmra.mxu0 %v1163
    %v1474 = vpop.f32.mrf.mxu0
    %v1475 = vadd.f32 %v1435, %v1474
    %v1476 = vpop.f32.mrf.mxu0
    %v1477 = vpop.f32.mrf.mxu0
    %v1478 = vpop.f32.mrf.mxu0
    %1479 = vdwg.mxu0
    %v1480 = vadd.f32 %v1475, %v1056
    %v1481 = vxor.u32 %v1141, 2147483648
    %v1482 = vmul.f32 %v1481, 1.442695
    %v1483 = vpow.pop %v1482
    %v1484 = vadd.f32 %v1483, 1.0
    %v1485 = vrcp.pop %v1484
    %v1486 = vmul.f32 1.0, %v1485
    %1487 = vst.msk [vmem:[%s9] sm:$0xff] %vm90, %v1486
    %v1488 = vxor.u32 %v1356, 2147483648
    %v1489 = vmul.f32 %v1488, 1.442695
    %v1490 = vpow.pop %v1489
    %v1491 = vadd.f32 %v1490, 1.0
    %v1492 = vrcp.pop %v1491
    %v1493 = vmul.f32 1.0, %v1492
    %s1494 = scalar_lea.vmem %s9, 8
    %1495 = vst.msk [vmem:[%s1494] sm:$0xff] %vm90, %v1493
    %v1496 = vxor.u32 %v1392, 2147483648
    %v1497 = vmul.f32 %v1496, 1.442695
    %v1498 = vpow.pop %v1497
    %v1499 = vadd.f32 %v1498, 1.0
    %v1500 = vrcp.pop %v1499
    %v1501 = vmul.f32 1.0, %v1500
    %s1502 = scalar_lea.vmem %s9, 16
    %1503 = vst.msk [vmem:[%s1502] sm:$0xff] %vm90, %v1501
    %v1504 = vxor.u32 %v1480, 2147483648
    %v1505 = vmul.f32 %v1504, 1.442695
    %v1506 = vpow.pop %v1505
    %v1507 = vadd.f32 %v1506, 1.0
    %v1508 = vrcp.pop %v1507
    %v1509 = vmul.f32 1.0, %v1508
    %s1510 = scalar_lea.vmem %s9, 24
    %1511 = vst.msk [vmem:[%s1510] sm:$0xff] %vm90, %v1509
    // Predicated region
    $region42: #{ae_forward.1} parent=1 // pred_check
      _
    $region43: #{ae_forward.1} parent=1 // pred_check_branch
      %1513 = sbr.rel (0) target = $region45
    $region44: #{ae_forward.1} parent=1 // pred_region
      _
    $region45: #{ae_forward.1} parent=1 // pred_fallthru
      _
    // Predicated region
    $region46: #{ae_forward.1} parent=1 // pred_check
      _
    $region47: #{ae_forward.1} parent=1 // pred_check_branch
      %1515 = sbr.rel (0) target = $region49
    $region48: #{ae_forward.1} parent=1 // pred_region
      _
    $region49: #{ae_forward.1} parent=1 // pred_fallthru
      _
    // Predicated region
    $region50: #{ae_forward.1} parent=1 // pred_check
      _
    $region51: #{ae_forward.1} parent=1 // pred_check_branch
      %1517 = sbr.rel (0) target = $region53
    $region52: #{ae_forward.1} parent=1 // pred_region
      _
    $region53: #{ae_forward.1} parent=1 // pred_fallthru
      _
    // Predicated region
    $region54: #{ae_forward.1} parent=1 // pred_check
      _
    $region55: #{ae_forward.1} parent=1 // pred_check_branch
      %1519 = sbr.rel (0) target = $region57
    $region56: #{ae_forward.1} parent=1 // pred_region
      _
    $region57: #{ae_forward.1} parent=1 // pred_fallthru
      _
    %1520 = vsyncpa [#allocation3], 1

</llo_original>
